<compile_context>
chip_gen: v7x
topology: tpu7x:2x2x1
jax: 0.10.0
libtpu: 0.0.40
codegen_flags: <defaults>
</compile_context>

<pallas_src>
import functools
import math

import jax
import jax.numpy as jnp
from jax import lax
from jax.experimental import pallas as pl
from jax.experimental.pallas import tpu as pltpu


# ----------------------------- hparams ------------------------------------- #
class HParams:
    vocab_size = 24
    hidden_size = 32
    num_attention_heads = 4
    intermediate_size = 64
    num_hidden_layers = 2
    max_position_embeddings = 32
    pad_token_id = 21
    layer_norm_eps = 1e-12
    hidden_dropout_prob = 0.1            # identity in eval
    attention_probs_dropout_prob = 0.1   # identity in eval
    initializer_range = 0.02
    hidden_act = "gelu"


# ----------------------------- slab layout ---------------------------------- #
_VEC_ORDER = ("b_qkv", "b_o", "ln1_g", "ln1_b", "b_ff1", "b_ff2", "ln2_g", "ln2_b")


def _slab_layout(hp):
    """Row offsets of every parameter inside the single (rows, 128) f32 slab."""
    H, I = hp.hidden_size, hp.intermediate_size
    VP = hp.vocab_size + hp.max_position_embeddings
    emb_ln = -(-VP // 8) * 8            # 8-aligned row block for the embedding LN vectors
    lay0 = emb_ln + 8                   # first encoder-layer block (8-aligned)
    lrows = 3 * H + I + 8               # w_qkv(H) + w_o(H) + w_ff1(H) + w_ff2(I) + 8 vector rows
    total = lay0 + hp.num_hidden_layers * lrows
    return dict(VP=VP, emb_ln=emb_ln, lay0=lay0, lrows=lrows,
                off_wo=H, off_wff1=2 * H, off_wff2=3 * H, off_vec=3 * H + I,
                total=total)


# ----------------------------- in-kernel helpers --------------------------- #
def _layernorm(v, g, b, eps):
    mean = jnp.mean(v, axis=-1, keepdims=True)
    c = v - mean
    var = jnp.mean(c * c, axis=-1, keepdims=True)
    return c * lax.rsqrt(var + eps) * g + b


def _gelu_erf(y):
    # exact (erf) GELU, matching torch.nn.functional.gelu default.
    # TODO(synk): the tanh approximation would route through the otherwise-idle
    # EUP on all generations; kept exact erf to preserve torch numerics.
    return 0.5 * y * (1.0 + lax.erf(y * (1.0 / math.sqrt(2.0))))


# ----------------------------- fused kernel -------------------------------- #
def _abrep_kernel(dyn_ref, aux_ref, slab_ref, out_ref, *, hp, B, S):
    H = hp.hidden_size
    nh = hp.num_attention_heads
    dh = H // nh
    I = hp.intermediate_size
    L = hp.num_hidden_layers
    eps = hp.layer_norm_eps
    BS = B * S
    lay = _slab_layout(hp)
    VP = lay["VP"]
    scale = 1.0 / math.sqrt(dh)

    # shape-dependent constant masks (host-built, one small DMA)
    head_mask = aux_ref[:, 0:H]                 # (nh*BS, H): 1 where row-head == col-head
    blk_sum = aux_ref[:, H:H + nh * BS]         # (nh*BS, nh*BS): block-diag ones (block = BS)

    onehot = dyn_ref[:, 0:VP]                   # (BS, V+P) merged token|position one-hot
    bias = dyn_ref[:, VP:VP + nh * BS]          # (BS, nh*BS) additive attention bias

    # ---- AbEmbeddings: ONE merged one-hot matmul, then LayerNorm -------------
    emb_tab = slab_ref[0:VP, 0:H]
    x = jnp.dot(onehot, emb_tab, preferred_element_type=jnp.float32)   # (BS, H)
    emb_g = slab_ref[lay["emb_ln"]:lay["emb_ln"] + 1, 0:H]
    emb_b = slab_ref[lay["emb_ln"] + 1:lay["emb_ln"] + 2, 0:H]
    x = _layernorm(x, emb_g, emb_b, eps)

    # ---- EncoderBlocks (block-diagonal multi-head attention) -----------------
    for l in range(L):
        base = lay["lay0"] + l * lay["lrows"]
        w_qkv = slab_ref[base:base + H, 0:3 * H]
        w_o = slab_ref[base + lay["off_wo"]:base + lay["off_wo"] + H, 0:H]
        w_ff1 = slab_ref[base + lay["off_wff1"]:base + lay["off_wff1"] + H, 0:I]
        w_ff2 = slab_ref[base + lay["off_wff2"]:base + lay["off_wff2"] + I, 0:H]
        v0 = base + lay["off_vec"]
        b_qkv = slab_ref[v0 + 0:v0 + 1, 0:3 * H]
        b_o = slab_ref[v0 + 1:v0 + 2, 0:H]
        ln1_g = slab_ref[v0 + 2:v0 + 3, 0:H]
        ln1_b = slab_ref[v0 + 3:v0 + 4, 0:H]
        b_ff1 = slab_ref[v0 + 4:v0 + 5, 0:I]
        b_ff2 = slab_ref[v0 + 5:v0 + 6, 0:H]
        ln2_g = slab_ref[v0 + 6:v0 + 7, 0:H]
        ln2_b = slab_ref[v0 + 7:v0 + 8, 0:H]

        qkv = jnp.dot(x, w_qkv, preferred_element_type=jnp.float32) + b_qkv   # (BS, 3H)
        q = qkv[:, 0:H]
        k = qkv[:, H:2 * H]
        v = qkv[:, 2 * H:3 * H]

        # head-expanded K/V: row h*BS+j holds token j restricted to head h's columns
        k_exp = jnp.concatenate([k] * nh, axis=0) * head_mask                 # (nh*BS, H)
        v_exp = jnp.concatenate([v] * nh, axis=0) * head_mask                 # (nh*BS, H)

        # every (batch, head) score block with ONE matmul:
        #   s[i, h*BS + j] = <q_i, k_j> restricted to head h
        s = lax.dot_general(q, k_exp, (((1,), (1,)), ((), ())),
                            preferred_element_type=jnp.float32)               # (BS, nh*BS)
        s = s * scale + bias
        m = jnp.max(s, axis=-1, keepdims=True)     # global row max: valid shift per block
        e = jnp.exp(s - m)
        # per-(head, batch-block) softmax denominators via one block-diag matmul
        denom = jnp.dot(e, blk_sum, preferred_element_type=jnp.float32)       # (BS, nh*BS)
        p = e / denom                               # exact divide (torch parity)
        attn = jnp.dot(p, v_exp, preferred_element_type=jnp.float32)          # (BS, H) head-concat

        a = jnp.dot(attn, w_o, preferred_element_type=jnp.float32) + b_o
        x = _layernorm(a + x, ln1_g, ln1_b, eps)                              # MHA block LN

        f = _gelu_erf(jnp.dot(x, w_ff1, preferred_element_type=jnp.float32) + b_ff1)
        f = jnp.dot(f, w_ff2, preferred_element_type=jnp.float32) + b_ff2
        x = _layernorm(f + x, ln2_g, ln2_b, eps)                              # FFN block LN

    out_ref[...] = x                                                          # (BS, H)


# ----------------------------- parameters ---------------------------------- #
def init_params(key, hp: HParams):
    H, I = hp.hidden_size, hp.intermediate_size
    std = hp.initializer_range

    def normal(k, shape):
        return std * jax.random.normal(k, shape, dtype=jnp.float32)

    keys = jax.random.split(key, 2 + 6 * hp.num_hidden_layers)
    params = {
        "tok_emb": normal(keys[0], (hp.vocab_size, H)),
        "pos_emb": normal(keys[1], (hp.max_position_embeddings, H)),
        "emb_ln_g": jnp.ones((H,), jnp.float32),
        "emb_ln_b": jnp.zeros((H,), jnp.float32),
        "layers": [],
    }
    for l in range(hp.num_hidden_layers):
        kq, ko, kf1, kf2, _, _ = keys[2 + 6 * l: 2 + 6 * (l + 1)]
        params["layers"].append({
            "w_qkv": normal(kq, (H, 3 * H)),
            "b_qkv": jnp.zeros((3 * H,), jnp.float32),
            "w_o": normal(ko, (H, H)),
            "b_o": jnp.zeros((H,), jnp.float32),
            "ln1_g": jnp.ones((H,), jnp.float32),
            "ln1_b": jnp.zeros((H,), jnp.float32),
            "w_ff1": normal(kf1, (H, I)),
            "b_ff1": jnp.zeros((I,), jnp.float32),
            "w_ff2": normal(kf2, (I, H)),
            "b_ff2": jnp.zeros((H,), jnp.float32),
            "ln2_g": jnp.ones((H,), jnp.float32),
            "ln2_b": jnp.zeros((H,), jnp.float32),
        })
    return params


def pack_params(params, hp: HParams):
    """Pack every weight/bias into one (rows, 128) f32 slab (single DMA)."""
    lay = _slab_layout(hp)
    slab = jnp.zeros((lay["total"], 128), jnp.float32)

    def put(s, row, a):
        a = jnp.asarray(a, jnp.float32)
        if a.ndim == 1:
            a = a.reshape(1, -1)
        return s.at[row:row + a.shape[0], 0:a.shape[1]].set(a)

    slab = put(slab, 0, jnp.concatenate([params["tok_emb"], params["pos_emb"]], axis=0))
    slab = put(slab, lay["emb_ln"], params["emb_ln_g"])
    slab = put(slab, lay["emb_ln"] + 1, params["emb_ln_b"])
    for l, lp in enumerate(params["layers"]):
        base = lay["lay0"] + l * lay["lrows"]
        slab = put(slab, base, lp["w_qkv"])
        slab = put(slab, base + lay["off_wo"], lp["w_o"])
        slab = put(slab, base + lay["off_wff1"], lp["w_ff1"])
        slab = put(slab, base + lay["off_wff2"], lp["w_ff2"])
        for i, name in enumerate(_VEC_ORDER):
            slab = put(slab, base + lay["off_vec"] + i, lp[name])
    return slab


# ----------------------------- forward pass --------------------------------- #
def abrep_forward(src, slab, hp: HParams):
    B, S = src.shape
    H = hp.hidden_size
    nh = hp.num_attention_heads
    dh = H // nh
    V = hp.vocab_size
    P = hp.max_position_embeddings
    pad = hp.pad_token_id
    BS = B * S

    src_i = src.astype(jnp.int32)
    src_flat = src_i.reshape(BS)

    # RoBERTa/AbLang position ids: cumsum(non-pad) * non-pad (pads -> 0), in XLA.
    notpad = (src_i != pad).astype(jnp.int32)
    pos_ids = (jnp.cumsum(notpad, axis=1) * notpad).reshape(BS)

    # merged token|position one-hot -> one embedding matmul inside the kernel
    onehot = jnp.concatenate(
        [jax.nn.one_hot(src_flat, V, dtype=jnp.float32),
         jax.nn.one_hot(pos_ids, P, dtype=jnp.float32)], axis=-1)            # (BS, V+P)

    # additive attention bias, replicated per head:
    #   * cross-batch blocks get -1e9 (they only exist because batches share the
    #     block-diagonal score matrix and must not attend to each other)
    #   * padded keys get +1.0 — literal torch semantics: nn.MultiheadAttention
    #     ADDS a float key_padding_mask (here 0/1) to the logits.
    # TODO(synk): change the 1.0 below to -1e9 if "mask padded keys out"
    # semantics is preferred over the literal torch float-mask behaviour.
    tok = jnp.arange(BS)
    same_batch = (tok[:, None] // S) == (tok[None, :] // S)
    pad_add = jnp.where(src_flat == pad, 1.0, 0.0)[None, :]
    bias = jnp.where(same_batch, pad_add, -1e9)                              # (BS, BS)
    bias = jnp.tile(bias, (1, nh))                                           # (BS, nh*BS)

    dyn = jnp.concatenate([onehot, bias], axis=-1).astype(jnp.float32)       # (BS, V+P+nh*BS)

    # shape-dependent constant masks for block-diagonal attention
    r = jnp.arange(nh * BS)[:, None]
    head_mask = (r // BS == jnp.arange(H)[None, :] // dh).astype(jnp.float32)      # (nh*BS, H)
    blk_sum = (r // BS == jnp.arange(nh * BS)[None, :] // BS).astype(jnp.float32)  # (nh*BS, nh*BS)
    aux = jnp.concatenate([head_mask, blk_sum], axis=-1)                     # (nh*BS, H+nh*BS)

    vmem = pl.BlockSpec(memory_space=pltpu.MemorySpace.VMEM)
    out = pl.pallas_call(
        functools.partial(_abrep_kernel, hp=hp, B=B, S=S),
        out_shape=jax.ShapeDtypeStruct((BS, H), jnp.float32),
        in_specs=[vmem, vmem, vmem],
        out_specs=vmem,
    )(dyn, aux, slab)
    return out.reshape(B, S, H)                                              # last_hidden_states


# ----------------------------- main ----------------------------------------- #
if __name__ == "__main__":
    hp = HParams()
    B, S = 2, 8

    key = jax.random.PRNGKey(0)
    k_param, k_tok = jax.random.split(key)
    params = init_params(k_param, hp)
    slab = pack_params(params, hp)         # packed once, reused every forward call

    # deterministic token ids, with explicit padding at the tail of batch 1
    src = jax.random.randint(k_tok, (B, S), 0, hp.vocab_size - 4, dtype=jnp.int32)
    src = src.at[1, -3:].set(hp.pad_token_id)

    fwd = jax.jit(functools.partial(abrep_forward, hp=hp))
    out = fwd(src, slab)
    jax.block_until_ready(out)

    assert out.shape == (B, S, hp.hidden_size)
    assert bool(jnp.all(jnp.isfinite(out)))
    print("KERNEL_OK")
</pallas_src>

<mosaic_0001>
module attributes {stable_mosaic.version = 11 : i64} {
  func.func @_abrep_kernel(%arg0: memref<16x120xf32, #tpu.memory_space<vmem>>, %arg1: memref<64x96xf32, #tpu.memory_space<vmem>>, %arg2: memref<400x128xf32, #tpu.memory_space<vmem>>, %arg3: memref<16x32xf32, #tpu.memory_space<vmem>>) attributes {dimension_semantics = [], scalar_prefetch = 0 : i64, scratch_operands = 0 : i64, tpu.core_type = #tpu.core_type<tc>} {
    %c0 = arith.constant 0 : index
    %c0_0 = arith.constant 0 : index
    %0 = vector.load %arg1[%c0, %c0_0] : memref<64x96xf32, #tpu.memory_space<vmem>>, vector<64x32xf32>
    %c0_1 = arith.constant 0 : index
    %c32 = arith.constant 32 : index
    %1 = vector.load %arg1[%c0_1, %c32] : memref<64x96xf32, #tpu.memory_space<vmem>>, vector<64x64xf32>
    %c0_2 = arith.constant 0 : index
    %c0_3 = arith.constant 0 : index
    %2 = vector.load %arg0[%c0_2, %c0_3] : memref<16x120xf32, #tpu.memory_space<vmem>>, vector<16x56xf32>
    %c0_4 = arith.constant 0 : index
    %c56 = arith.constant 56 : index
    %3 = vector.load %arg0[%c0_4, %c56] : memref<16x120xf32, #tpu.memory_space<vmem>>, vector<16x64xf32>
    %c0_5 = arith.constant 0 : index
    %c0_6 = arith.constant 0 : index
    %4 = vector.load %arg2[%c0_5, %c0_6] : memref<400x128xf32, #tpu.memory_space<vmem>>, vector<56x32xf32>
    %cst = arith.constant dense<0.000000e+00> : vector<16x32xf32>
    %5 = tpu.matmul %2, %4, %cst {dimension_numbers = #tpu.dot_dimension_numbers<[1], [0], [0], [1], [0, 0, 1, 1], [], []>} : vector<16x56xf32>, vector<56x32xf32>, vector<16x32xf32> -> vector<16x32xf32>
    %c56_7 = arith.constant 56 : index
    %c0_8 = arith.constant 0 : index
    %6 = vector.load %arg2[%c56_7, %c0_8] : memref<400x128xf32, #tpu.memory_space<vmem>>, vector<1x32xf32>
    %c57 = arith.constant 57 : index
    %c0_9 = arith.constant 0 : index
    %7 = vector.load %arg2[%c57, %c0_9] : memref<400x128xf32, #tpu.memory_space<vmem>>, vector<1x32xf32>
    %cst_10 = arith.constant dense<0.000000e+00> : vector<16xf32>
    %8 = vector.multi_reduction <add>, %5, %cst_10 [1] : vector<16x32xf32> to vector<16xf32>
    %9 = vector.shape_cast %8 : vector<16xf32> to vector<16x1xf32>
    %cst_11 = arith.constant 3.200000e+01 : f32
    %10 = vector.broadcast %cst_11 : f32 to vector<16x1xf32>
    %11 = arith.divf %9, %10 : vector<16x1xf32>
    %12 = vector.broadcast %11 : vector<16x1xf32> to vector<16x32xf32>
    %13 = arith.subf %5, %12 : vector<16x32xf32>
    %14 = arith.mulf %13, %13 : vector<16x32xf32>
    %cst_12 = arith.constant dense<0.000000e+00> : vector<16xf32>
    %15 = vector.multi_reduction <add>, %14, %cst_12 [1] : vector<16x32xf32> to vector<16xf32>
    %16 = vector.shape_cast %15 : vector<16xf32> to vector<16x1xf32>
    %cst_13 = arith.constant 3.200000e+01 : f32
    %17 = vector.broadcast %cst_13 : f32 to vector<16x1xf32>
    %18 = arith.divf %16, %17 : vector<16x1xf32>
    %cst_14 = arith.constant 9.99999996E-13 : f32
    %19 = vector.broadcast %cst_14 : f32 to vector<16x1xf32>
    %20 = arith.addf %18, %19 : vector<16x1xf32>
    %21 = math.rsqrt %20 : vector<16x1xf32>
    %22 = vector.broadcast %21 : vector<16x1xf32> to vector<16x32xf32>
    %23 = arith.mulf %13, %22 : vector<16x32xf32>
    %24 = vector.broadcast %6 : vector<1x32xf32> to vector<16x32xf32>
    %25 = arith.mulf %23, %24 : vector<16x32xf32>
    %26 = vector.broadcast %7 : vector<1x32xf32> to vector<16x32xf32>
    %27 = arith.addf %25, %26 : vector<16x32xf32>
    %c64 = arith.constant 64 : index
    %c0_15 = arith.constant 0 : index
    %28 = vector.load %arg2[%c64, %c0_15] : memref<400x128xf32, #tpu.memory_space<vmem>>, vector<32x96xf32>
    %c96 = arith.constant 96 : index
    %c0_16 = arith.constant 0 : index
    %29 = vector.load %arg2[%c96, %c0_16] : memref<400x128xf32, #tpu.memory_space<vmem>>, vector<32x32xf32>
    %c128 = arith.constant 128 : index
    %c0_17 = arith.constant 0 : index
    %30 = vector.load %arg2[%c128, %c0_17] : memref<400x128xf32, #tpu.memory_space<vmem>>, vector<32x64xf32>
    %c160 = arith.constant 160 : index
    %c0_18 = arith.constant 0 : index
    %31 = vector.load %arg2[%c160, %c0_18] : memref<400x128xf32, #tpu.memory_space<vmem>>, vector<64x32xf32>
    %c224 = arith.constant 224 : index
    %c0_19 = arith.constant 0 : index
    %32 = vector.load %arg2[%c224, %c0_19] : memref<400x128xf32, #tpu.memory_space<vmem>>, vector<1x96xf32>
    %c225 = arith.constant 225 : index
    %c0_20 = arith.constant 0 : index
    %33 = vector.load %arg2[%c225, %c0_20] : memref<400x128xf32, #tpu.memory_space<vmem>>, vector<1x32xf32>
    %c226 = arith.constant 226 : index
    %c0_21 = arith.constant 0 : index
    %34 = vector.load %arg2[%c226, %c0_21] : memref<400x128xf32, #tpu.memory_space<vmem>>, vector<1x32xf32>
    %c227 = arith.constant 227 : index
    %c0_22 = arith.constant 0 : index
    %35 = vector.load %arg2[%c227, %c0_22] : memref<400x128xf32, #tpu.memory_space<vmem>>, vector<1x32xf32>
    %c228 = arith.constant 228 : index
    %c0_23 = arith.constant 0 : index
    %36 = vector.load %arg2[%c228, %c0_23] : memref<400x128xf32, #tpu.memory_space<vmem>>, vector<1x64xf32>
    %c229 = arith.constant 229 : index
    %c0_24 = arith.constant 0 : index
    %37 = vector.load %arg2[%c229, %c0_24] : memref<400x128xf32, #tpu.memory_space<vmem>>, vector<1x32xf32>
    %c230 = arith.constant 230 : index
    %c0_25 = arith.constant 0 : index
    %38 = vector.load %arg2[%c230, %c0_25] : memref<400x128xf32, #tpu.memory_space<vmem>>, vector<1x32xf32>
    %c231 = arith.constant 231 : index
    %c0_26 = arith.constant 0 : index
    %39 = vector.load %arg2[%c231, %c0_26] : memref<400x128xf32, #tpu.memory_space<vmem>>, vector<1x32xf32>
    %cst_27 = arith.constant dense<0.000000e+00> : vector<16x96xf32>
    %40 = tpu.matmul %27, %28, %cst_27 {dimension_numbers = #tpu.dot_dimension_numbers<[1], [0], [0], [1], [0, 0, 1, 1], [], []>} : vector<16x32xf32>, vector<32x96xf32>, vector<16x96xf32> -> vector<16x96xf32>
    %41 = vector.broadcast %32 : vector<1x96xf32> to vector<16x96xf32>
    %42 = arith.addf %40, %41 : vector<16x96xf32>
    %43 = vector.extract_strided_slice %42 {offsets = [0, 0], sizes = [16, 32], strides = [1, 1]} : vector<16x96xf32> to vector<16x32xf32>
    %44 = vector.extract_strided_slice %42 {offsets = [0, 32], sizes = [16, 32], strides = [1, 1]} : vector<16x96xf32> to vector<16x32xf32>
    %45 = vector.extract_strided_slice %42 {offsets = [0, 64], sizes = [16, 32], strides = [1, 1]} : vector<16x96xf32> to vector<16x32xf32>
    %46 = tpu.concatenate %44, %44, %44, %44 in 0 : vector<16x32xf32>, vector<16x32xf32>, vector<16x32xf32>, vector<16x32xf32> -> vector<64x32xf32>
    %47 = arith.mulf %46, %0 : vector<64x32xf32>
    %48 = tpu.concatenate %45, %45, %45, %45 in 0 : vector<16x32xf32>, vector<16x32xf32>, vector<16x32xf32>, vector<16x32xf32> -> vector<64x32xf32>
    %49 = arith.mulf %48, %0 : vector<64x32xf32>
    %cst_28 = arith.constant dense<0.000000e+00> : vector<16x64xf32>
    %50 = tpu.matmul %43, %47, %cst_28 {dimension_numbers = #tpu.dot_dimension_numbers<[1], [1], [0], [0], [0, 0, 1, 0], [], []>} : vector<16x32xf32>, vector<64x32xf32>, vector<16x64xf32> -> vector<16x64xf32>
    %cst_29 = arith.constant 0.353553385 : f32
    %51 = vector.broadcast %cst_29 : f32 to vector<16x64xf32>
    %52 = arith.mulf %50, %51 : vector<16x64xf32>
    %53 = arith.addf %52, %3 : vector<16x64xf32>
    %cst_30 = arith.constant dense<0xFF800000> : vector<16xf32>
    %54 = vector.multi_reduction <maximumf>, %53, %cst_30 [1] : vector<16x64xf32> to vector<16xf32>
    %55 = vector.shape_cast %54 : vector<16xf32> to vector<16x1xf32>
    %56 = vector.broadcast %55 : vector<16x1xf32> to vector<16x64xf32>
    %57 = arith.subf %53, %56 : vector<16x64xf32>
    %58 = math.exp %57 : vector<16x64xf32>
    %cst_31 = arith.constant dense<0.000000e+00> : vector<16x64xf32>
    %59 = tpu.matmul %58, %1, %cst_31 {dimension_numbers = #tpu.dot_dimension_numbers<[1], [0], [0], [1], [0, 0, 1, 1], [], []>} : vector<16x64xf32>, vector<64x64xf32>, vector<16x64xf32> -> vector<16x64xf32>
    %60 = arith.divf %58, %59 : vector<16x64xf32>
    %cst_32 = arith.constant dense<0.000000e+00> : vector<16x32xf32>
    %61 = tpu.matmul %60, %49, %cst_32 {dimension_numbers = #tpu.dot_dimension_numbers<[1], [0], [0], [1], [0, 0, 1, 1], [], []>} : vector<16x64xf32>, vector<64x32xf32>, vector<16x32xf32> -> vector<16x32xf32>
    %cst_33 = arith.constant dense<0.000000e+00> : vector<16x32xf32>
    %62 = tpu.matmul %61, %29, %cst_33 {dimension_numbers = #tpu.dot_dimension_numbers<[1], [0], [0], [1], [0, 0, 1, 1], [], []>} : vector<16x32xf32>, vector<32x32xf32>, vector<16x32xf32> -> vector<16x32xf32>
    %63 = vector.broadcast %33 : vector<1x32xf32> to vector<16x32xf32>
    %64 = arith.addf %62, %63 : vector<16x32xf32>
    %65 = arith.addf %64, %27 : vector<16x32xf32>
    %cst_34 = arith.constant dense<0.000000e+00> : vector<16xf32>
    %66 = vector.multi_reduction <add>, %65, %cst_34 [1] : vector<16x32xf32> to vector<16xf32>
    %67 = vector.shape_cast %66 : vector<16xf32> to vector<16x1xf32>
    %cst_35 = arith.constant 3.200000e+01 : f32
    %68 = vector.broadcast %cst_35 : f32 to vector<16x1xf32>
    %69 = arith.divf %67, %68 : vector<16x1xf32>
    %70 = vector.broadcast %69 : vector<16x1xf32> to vector<16x32xf32>
    %71 = arith.subf %65, %70 : vector<16x32xf32>
    %72 = arith.mulf %71, %71 : vector<16x32xf32>
    %cst_36 = arith.constant dense<0.000000e+00> : vector<16xf32>
    %73 = vector.multi_reduction <add>, %72, %cst_36 [1] : vector<16x32xf32> to vector<16xf32>
    %74 = vector.shape_cast %73 : vector<16xf32> to vector<16x1xf32>
    %cst_37 = arith.constant 3.200000e+01 : f32
    %75 = vector.broadcast %cst_37 : f32 to vector<16x1xf32>
    %76 = arith.divf %74, %75 : vector<16x1xf32>
    %cst_38 = arith.constant 9.99999996E-13 : f32
    %77 = vector.broadcast %cst_38 : f32 to vector<16x1xf32>
    %78 = arith.addf %76, %77 : vector<16x1xf32>
    %79 = math.rsqrt %78 : vector<16x1xf32>
    %80 = vector.broadcast %79 : vector<16x1xf32> to vector<16x32xf32>
    %81 = arith.mulf %71, %80 : vector<16x32xf32>
    %82 = vector.broadcast %34 : vector<1x32xf32> to vector<16x32xf32>
    %83 = arith.mulf %81, %82 : vector<16x32xf32>
    %84 = vector.broadcast %35 : vector<1x32xf32> to vector<16x32xf32>
    %85 = arith.addf %83, %84 : vector<16x32xf32>
    %cst_39 = arith.constant dense<0.000000e+00> : vector<16x64xf32>
    %86 = tpu.matmul %85, %30, %cst_39 {dimension_numbers = #tpu.dot_dimension_numbers<[1], [0], [0], [1], [0, 0, 1, 1], [], []>} : vector<16x32xf32>, vector<32x64xf32>, vector<16x64xf32> -> vector<16x64xf32>
    %87 = vector.broadcast %36 : vector<1x64xf32> to vector<16x64xf32>
    %88 = arith.addf %86, %87 : vector<16x64xf32>
    %cst_40 = arith.constant 5.000000e-01 : f32
    %89 = vector.broadcast %cst_40 : f32 to vector<16x64xf32>
    %90 = arith.mulf %89, %88 : vector<16x64xf32>
    %cst_41 = arith.constant 0.707106769 : f32
    %91 = vector.broadcast %cst_41 : f32 to vector<16x64xf32>
    %92 = arith.mulf %88, %91 : vector<16x64xf32>
    %93 = math.erf %92 : vector<16x64xf32>
    %cst_42 = arith.constant 1.000000e+00 : f32
    %94 = vector.broadcast %cst_42 : f32 to vector<16x64xf32>
    %95 = arith.addf %94, %93 : vector<16x64xf32>
    %96 = arith.mulf %90, %95 : vector<16x64xf32>
    %cst_43 = arith.constant dense<0.000000e+00> : vector<16x32xf32>
    %97 = tpu.matmul %96, %31, %cst_43 {dimension_numbers = #tpu.dot_dimension_numbers<[1], [0], [0], [1], [0, 0, 1, 1], [], []>} : vector<16x64xf32>, vector<64x32xf32>, vector<16x32xf32> -> vector<16x32xf32>
    %98 = vector.broadcast %37 : vector<1x32xf32> to vector<16x32xf32>
    %99 = arith.addf %97, %98 : vector<16x32xf32>
    %100 = arith.addf %99, %85 : vector<16x32xf32>
    %cst_44 = arith.constant dense<0.000000e+00> : vector<16xf32>
    %101 = vector.multi_reduction <add>, %100, %cst_44 [1] : vector<16x32xf32> to vector<16xf32>
    %102 = vector.shape_cast %101 : vector<16xf32> to vector<16x1xf32>
    %cst_45 = arith.constant 3.200000e+01 : f32
    %103 = vector.broadcast %cst_45 : f32 to vector<16x1xf32>
    %104 = arith.divf %102, %103 : vector<16x1xf32>
    %105 = vector.broadcast %104 : vector<16x1xf32> to vector<16x32xf32>
    %106 = arith.subf %100, %105 : vector<16x32xf32>
    %107 = arith.mulf %106, %106 : vector<16x32xf32>
    %cst_46 = arith.constant dense<0.000000e+00> : vector<16xf32>
    %108 = vector.multi_reduction <add>, %107, %cst_46 [1] : vector<16x32xf32> to vector<16xf32>
    %109 = vector.shape_cast %108 : vector<16xf32> to vector<16x1xf32>
    %cst_47 = arith.constant 3.200000e+01 : f32
    %110 = vector.broadcast %cst_47 : f32 to vector<16x1xf32>
    %111 = arith.divf %109, %110 : vector<16x1xf32>
    %cst_48 = arith.constant 9.99999996E-13 : f32
    %112 = vector.broadcast %cst_48 : f32 to vector<16x1xf32>
    %113 = arith.addf %111, %112 : vector<16x1xf32>
    %114 = math.rsqrt %113 : vector<16x1xf32>
    %115 = vector.broadcast %114 : vector<16x1xf32> to vector<16x32xf32>
    %116 = arith.mulf %106, %115 : vector<16x32xf32>
    %117 = vector.broadcast %38 : vector<1x32xf32> to vector<16x32xf32>
    %118 = arith.mulf %116, %117 : vector<16x32xf32>
    %119 = vector.broadcast %39 : vector<1x32xf32> to vector<16x32xf32>
    %120 = arith.addf %118, %119 : vector<16x32xf32>
    %c232 = arith.constant 232 : index
    %c0_49 = arith.constant 0 : index
    %121 = vector.load %arg2[%c232, %c0_49] : memref<400x128xf32, #tpu.memory_space<vmem>>, vector<32x96xf32>
    %c264 = arith.constant 264 : index
    %c0_50 = arith.constant 0 : index
    %122 = vector.load %arg2[%c264, %c0_50] : memref<400x128xf32, #tpu.memory_space<vmem>>, vector<32x32xf32>
    %c296 = arith.constant 296 : index
    %c0_51 = arith.constant 0 : index
    %123 = vector.load %arg2[%c296, %c0_51] : memref<400x128xf32, #tpu.memory_space<vmem>>, vector<32x64xf32>
    %c328 = arith.constant 328 : index
    %c0_52 = arith.constant 0 : index
    %124 = vector.load %arg2[%c328, %c0_52] : memref<400x128xf32, #tpu.memory_space<vmem>>, vector<64x32xf32>
    %c392 = arith.constant 392 : index
    %c0_53 = arith.constant 0 : index
    %125 = vector.load %arg2[%c392, %c0_53] : memref<400x128xf32, #tpu.memory_space<vmem>>, vector<1x96xf32>
    %c393 = arith.constant 393 : index
    %c0_54 = arith.constant 0 : index
    %126 = vector.load %arg2[%c393, %c0_54] : memref<400x128xf32, #tpu.memory_space<vmem>>, vector<1x32xf32>
    %c394 = arith.constant 394 : index
    %c0_55 = arith.constant 0 : index
    %127 = vector.load %arg2[%c394, %c0_55] : memref<400x128xf32, #tpu.memory_space<vmem>>, vector<1x32xf32>
    %c395 = arith.constant 395 : index
    %c0_56 = arith.constant 0 : index
    %128 = vector.load %arg2[%c395, %c0_56] : memref<400x128xf32, #tpu.memory_space<vmem>>, vector<1x32xf32>
    %c396 = arith.constant 396 : index
    %c0_57 = arith.constant 0 : index
    %129 = vector.load %arg2[%c396, %c0_57] : memref<400x128xf32, #tpu.memory_space<vmem>>, vector<1x64xf32>
    %c397 = arith.constant 397 : index
    %c0_58 = arith.constant 0 : index
    %130 = vector.load %arg2[%c397, %c0_58] : memref<400x128xf32, #tpu.memory_space<vmem>>, vector<1x32xf32>
    %c398 = arith.constant 398 : index
    %c0_59 = arith.constant 0 : index
    %131 = vector.load %arg2[%c398, %c0_59] : memref<400x128xf32, #tpu.memory_space<vmem>>, vector<1x32xf32>
    %c399 = arith.constant 399 : index
    %c0_60 = arith.constant 0 : index
    %132 = vector.load %arg2[%c399, %c0_60] : memref<400x128xf32, #tpu.memory_space<vmem>>, vector<1x32xf32>
    %cst_61 = arith.constant dense<0.000000e+00> : vector<16x96xf32>
    %133 = tpu.matmul %120, %121, %cst_61 {dimension_numbers = #tpu.dot_dimension_numbers<[1], [0], [0], [1], [0, 0, 1, 1], [], []>} : vector<16x32xf32>, vector<32x96xf32>, vector<16x96xf32> -> vector<16x96xf32>
    %134 = vector.broadcast %125 : vector<1x96xf32> to vector<16x96xf32>
    %135 = arith.addf %133, %134 : vector<16x96xf32>
    %136 = vector.extract_strided_slice %135 {offsets = [0, 0], sizes = [16, 32], strides = [1, 1]} : vector<16x96xf32> to vector<16x32xf32>
    %137 = vector.extract_strided_slice %135 {offsets = [0, 32], sizes = [16, 32], strides = [1, 1]} : vector<16x96xf32> to vector<16x32xf32>
    %138 = vector.extract_strided_slice %135 {offsets = [0, 64], sizes = [16, 32], strides = [1, 1]} : vector<16x96xf32> to vector<16x32xf32>
    %139 = tpu.concatenate %137, %137, %137, %137 in 0 : vector<16x32xf32>, vector<16x32xf32>, vector<16x32xf32>, vector<16x32xf32> -> vector<64x32xf32>
    %140 = arith.mulf %139, %0 : vector<64x32xf32>
    %141 = tpu.concatenate %138, %138, %138, %138 in 0 : vector<16x32xf32>, vector<16x32xf32>, vector<16x32xf32>, vector<16x32xf32> -> vector<64x32xf32>
    %142 = arith.mulf %141, %0 : vector<64x32xf32>
    %cst_62 = arith.constant dense<0.000000e+00> : vector<16x64xf32>
    %143 = tpu.matmul %136, %140, %cst_62 {dimension_numbers = #tpu.dot_dimension_numbers<[1], [1], [0], [0], [0, 0, 1, 0], [], []>} : vector<16x32xf32>, vector<64x32xf32>, vector<16x64xf32> -> vector<16x64xf32>
    %cst_63 = arith.constant 0.353553385 : f32
    %144 = vector.broadcast %cst_63 : f32 to vector<16x64xf32>
    %145 = arith.mulf %143, %144 : vector<16x64xf32>
    %146 = arith.addf %145, %3 : vector<16x64xf32>
    %cst_64 = arith.constant dense<0xFF800000> : vector<16xf32>
    %147 = vector.multi_reduction <maximumf>, %146, %cst_64 [1] : vector<16x64xf32> to vector<16xf32>
    %148 = vector.shape_cast %147 : vector<16xf32> to vector<16x1xf32>
    %149 = vector.broadcast %148 : vector<16x1xf32> to vector<16x64xf32>
    %150 = arith.subf %146, %149 : vector<16x64xf32>
    %151 = math.exp %150 : vector<16x64xf32>
    %cst_65 = arith.constant dense<0.000000e+00> : vector<16x64xf32>
    %152 = tpu.matmul %151, %1, %cst_65 {dimension_numbers = #tpu.dot_dimension_numbers<[1], [0], [0], [1], [0, 0, 1, 1], [], []>} : vector<16x64xf32>, vector<64x64xf32>, vector<16x64xf32> -> vector<16x64xf32>
    %153 = arith.divf %151, %152 : vector<16x64xf32>
    %cst_66 = arith.constant dense<0.000000e+00> : vector<16x32xf32>
    %154 = tpu.matmul %153, %142, %cst_66 {dimension_numbers = #tpu.dot_dimension_numbers<[1], [0], [0], [1], [0, 0, 1, 1], [], []>} : vector<16x64xf32>, vector<64x32xf32>, vector<16x32xf32> -> vector<16x32xf32>
    %cst_67 = arith.constant dense<0.000000e+00> : vector<16x32xf32>
    %155 = tpu.matmul %154, %122, %cst_67 {dimension_numbers = #tpu.dot_dimension_numbers<[1], [0], [0], [1], [0, 0, 1, 1], [], []>} : vector<16x32xf32>, vector<32x32xf32>, vector<16x32xf32> -> vector<16x32xf32>
    %156 = vector.broadcast %126 : vector<1x32xf32> to vector<16x32xf32>
    %157 = arith.addf %155, %156 : vector<16x32xf32>
    %158 = arith.addf %157, %120 : vector<16x32xf32>
    %cst_68 = arith.constant dense<0.000000e+00> : vector<16xf32>
    %159 = vector.multi_reduction <add>, %158, %cst_68 [1] : vector<16x32xf32> to vector<16xf32>
    %160 = vector.shape_cast %159 : vector<16xf32> to vector<16x1xf32>
    %cst_69 = arith.constant 3.200000e+01 : f32
    %161 = vector.broadcast %cst_69 : f32 to vector<16x1xf32>
    %162 = arith.divf %160, %161 : vector<16x1xf32>
    %163 = vector.broadcast %162 : vector<16x1xf32> to vector<16x32xf32>
    %164 = arith.subf %158, %163 : vector<16x32xf32>
    %165 = arith.mulf %164, %164 : vector<16x32xf32>
    %cst_70 = arith.constant dense<0.000000e+00> : vector<16xf32>
    %166 = vector.multi_reduction <add>, %165, %cst_70 [1] : vector<16x32xf32> to vector<16xf32>
    %167 = vector.shape_cast %166 : vector<16xf32> to vector<16x1xf32>
    %cst_71 = arith.constant 3.200000e+01 : f32
    %168 = vector.broadcast %cst_71 : f32 to vector<16x1xf32>
    %169 = arith.divf %167, %168 : vector<16x1xf32>
    %cst_72 = arith.constant 9.99999996E-13 : f32
    %170 = vector.broadcast %cst_72 : f32 to vector<16x1xf32>
    %171 = arith.addf %169, %170 : vector<16x1xf32>
    %172 = math.rsqrt %171 : vector<16x1xf32>
    %173 = vector.broadcast %172 : vector<16x1xf32> to vector<16x32xf32>
    %174 = arith.mulf %164, %173 : vector<16x32xf32>
    %175 = vector.broadcast %127 : vector<1x32xf32> to vector<16x32xf32>
    %176 = arith.mulf %174, %175 : vector<16x32xf32>
    %177 = vector.broadcast %128 : vector<1x32xf32> to vector<16x32xf32>
    %178 = arith.addf %176, %177 : vector<16x32xf32>
    %cst_73 = arith.constant dense<0.000000e+00> : vector<16x64xf32>
    %179 = tpu.matmul %178, %123, %cst_73 {dimension_numbers = #tpu.dot_dimension_numbers<[1], [0], [0], [1], [0, 0, 1, 1], [], []>} : vector<16x32xf32>, vector<32x64xf32>, vector<16x64xf32> -> vector<16x64xf32>
    %180 = vector.broadcast %129 : vector<1x64xf32> to vector<16x64xf32>
    %181 = arith.addf %179, %180 : vector<16x64xf32>
    %cst_74 = arith.constant 5.000000e-01 : f32
    %182 = vector.broadcast %cst_74 : f32 to vector<16x64xf32>
    %183 = arith.mulf %182, %181 : vector<16x64xf32>
    %cst_75 = arith.constant 0.707106769 : f32
    %184 = vector.broadcast %cst_75 : f32 to vector<16x64xf32>
    %185 = arith.mulf %181, %184 : vector<16x64xf32>
    %186 = math.erf %185 : vector<16x64xf32>
    %cst_76 = arith.constant 1.000000e+00 : f32
    %187 = vector.broadcast %cst_76 : f32 to vector<16x64xf32>
    %188 = arith.addf %187, %186 : vector<16x64xf32>
    %189 = arith.mulf %183, %188 : vector<16x64xf32>
    %cst_77 = arith.constant dense<0.000000e+00> : vector<16x32xf32>
    %190 = tpu.matmul %189, %124, %cst_77 {dimension_numbers = #tpu.dot_dimension_numbers<[1], [0], [0], [1], [0, 0, 1, 1], [], []>} : vector<16x64xf32>, vector<64x32xf32>, vector<16x32xf32> -> vector<16x32xf32>
    %191 = vector.broadcast %130 : vector<1x32xf32> to vector<16x32xf32>
    %192 = arith.addf %190, %191 : vector<16x32xf32>
    %193 = arith.addf %192, %178 : vector<16x32xf32>
    %cst_78 = arith.constant dense<0.000000e+00> : vector<16xf32>
    %194 = vector.multi_reduction <add>, %193, %cst_78 [1] : vector<16x32xf32> to vector<16xf32>
    %195 = vector.shape_cast %194 : vector<16xf32> to vector<16x1xf32>
    %cst_79 = arith.constant 3.200000e+01 : f32
    %196 = vector.broadcast %cst_79 : f32 to vector<16x1xf32>
    %197 = arith.divf %195, %196 : vector<16x1xf32>
    %198 = vector.broadcast %197 : vector<16x1xf32> to vector<16x32xf32>
    %199 = arith.subf %193, %198 : vector<16x32xf32>
    %200 = arith.mulf %199, %199 : vector<16x32xf32>
    %cst_80 = arith.constant dense<0.000000e+00> : vector<16xf32>
    %201 = vector.multi_reduction <add>, %200, %cst_80 [1] : vector<16x32xf32> to vector<16xf32>
    %202 = vector.shape_cast %201 : vector<16xf32> to vector<16x1xf32>
    %cst_81 = arith.constant 3.200000e+01 : f32
    %203 = vector.broadcast %cst_81 : f32 to vector<16x1xf32>
    %204 = arith.divf %202, %203 : vector<16x1xf32>
    %cst_82 = arith.constant 9.99999996E-13 : f32
    %205 = vector.broadcast %cst_82 : f32 to vector<16x1xf32>
    %206 = arith.addf %204, %205 : vector<16x1xf32>
    %207 = math.rsqrt %206 : vector<16x1xf32>
    %208 = vector.broadcast %207 : vector<16x1xf32> to vector<16x32xf32>
    %209 = arith.mulf %199, %208 : vector<16x32xf32>
    %210 = vector.broadcast %131 : vector<1x32xf32> to vector<16x32xf32>
    %211 = arith.mulf %209, %210 : vector<16x32xf32>
    %212 = vector.broadcast %132 : vector<1x32xf32> to vector<16x32xf32>
    %213 = arith.addf %211, %212 : vector<16x32xf32>
    %c0_83 = arith.constant 0 : index
    %c0_84 = arith.constant 0 : index
    %214 = vector.load %arg3[%c0_83, %c0_84] : memref<16x32xf32, #tpu.memory_space<vmem>>, vector<16x32xf32>
    tpu.vector_store %arg3[%c0_83, %c0_84], %213 {strides = array<i32>} : memref<16x32xf32, #tpu.memory_space<vmem>>, vector<16x32xf32>,
    return
  }
}

</mosaic_0001>

<llo_original>
// kernel: eq.1
$region0: #{eq.1}
  %s0 = inlined_call_operand.vmem [shape: s32[2,8], index: 0, kind: input, shape index: {}]
  %s1 = inlined_call_operand.vmem [shape: s32[16], index: 1, kind: output, shape index: {}]
  $region1: #{eq.1} parent=0
    #allocation0 [shape = 'u8[4096]{0}', space=vmem, size = 0x1000, scoped, tag = 'scoped mem for output reshape']
    #allocation1 [shape = 'u8[4096]{0}', space=vmem, size = 0x1000, scoped, tag = 'scoped mem for input reshape']
    %s3 = sshllo.u32 0, 2
    %v4 = vld [vmem:[%s0] sm:%s3]
    %5 = vst [vmem:[#allocation1] sm:%s3] %v4
    %v6 = vld [vmem:[#allocation1] sm:$0x1]
    %vm7 = vcmask 64512
    %8 = vst.msk [vmem:[#allocation0] sm:$0x1] %vm7, %v6
    %s9 = scalar_lea.vmem [#allocation1], 1
    %v10 = vld [vmem:[%s9] sm:$0x1]
    %11 = vrot.lane.b32.xlu0 %v10, 8
    %v12 = vpop.permute.xlu0 %11
    %vm13 = vcmask 130112
    %14 = vst.msk [vmem:[#allocation0] sm:$0x1] %vm13, %v12
    %s16 = sshllo.u32 0, 1
    %v18 = vld [vmem:[#allocation0] sm:%s16]
    %s19 = sshllo.u32 0, 1
    %20 = vst [vmem:[%s1] sm:%s19] %v18

// kernel: tile.9
$region0: #{tile.9}
  %s0 = inlined_call_operand.vmem [shape: f32[16,4,16], index: 0, kind: input, shape index: {}]
  %s1 = inlined_call_operand.vmem [shape: f32[16,64], index: 1, kind: output, shape index: {}]
  $region1: #{tile.9} parent=0
    #allocation0 [shape = 'u8[65536]{0}', space=vmem, size = 0x10000, scoped, tag = 'scoped mem for input reshape']
    %s3 = sshllo.u32 0, 4
    %s4 = smul.addr 4, 15
    %s5 = scalar_lea.vmem %s0, %s4
    %v6 = vld [vmem:[%s5] sm:%s3]
    %s7 = scalar_lea.vmem [#allocation0], 120
    %8 = vst [vmem:[%s7] sm:%s3] %v6
    %s9 = smul.addr 4, 14
    %s10 = scalar_lea.vmem %s0, %s9
    %v11 = vld [vmem:[%s10] sm:%s3]
    %s12 = scalar_lea.vmem [#allocation0], 112
    %13 = vst [vmem:[%s12] sm:%s3] %v11
    %s14 = smul.addr 4, 13
    %s15 = scalar_lea.vmem %s0, %s14
    %v16 = vld [vmem:[%s15] sm:%s3]
    %s17 = scalar_lea.vmem [#allocation0], 104
    %18 = vst [vmem:[%s17] sm:%s3] %v16
    %s19 = smul.addr 4, 12
    %s20 = scalar_lea.vmem %s0, %s19
    %v21 = vld [vmem:[%s20] sm:%s3]
    %s22 = scalar_lea.vmem [#allocation0], 96
    %23 = vst [vmem:[%s22] sm:%s3] %v21
    %s24 = smul.addr 4, 11
    %s25 = scalar_lea.vmem %s0, %s24
    %v26 = vld [vmem:[%s25] sm:%s3]
    %s27 = scalar_lea.vmem [#allocation0], 88
    %28 = vst [vmem:[%s27] sm:%s3] %v26
    %s29 = smul.addr 4, 10
    %s30 = scalar_lea.vmem %s0, %s29
    %v31 = vld [vmem:[%s30] sm:%s3]
    %s32 = scalar_lea.vmem [#allocation0], 80
    %33 = vst [vmem:[%s32] sm:%s3] %v31
    %s34 = smul.addr 4, 9
    %s35 = scalar_lea.vmem %s0, %s34
    %v36 = vld [vmem:[%s35] sm:%s3]
    %s37 = scalar_lea.vmem [#allocation0], 72
    %38 = vst [vmem:[%s37] sm:%s3] %v36
    %s39 = smul.addr 4, 8
    %s40 = scalar_lea.vmem %s0, %s39
    %v41 = vld [vmem:[%s40] sm:%s3]
    %s42 = scalar_lea.vmem [#allocation0], 64
    %43 = vst [vmem:[%s42] sm:%s3] %v41
    %s44 = smul.addr 4, 7
    %s45 = scalar_lea.vmem %s0, %s44
    %v46 = vld [vmem:[%s45] sm:%s3]
    %s47 = scalar_lea.vmem [#allocation0], 56
    %48 = vst [vmem:[%s47] sm:%s3] %v46
    %s49 = smul.addr 4, 6
    %s50 = scalar_lea.vmem %s0, %s49
    %v51 = vld [vmem:[%s50] sm:%s3]
    %s52 = scalar_lea.vmem [#allocation0], 48
    %53 = vst [vmem:[%s52] sm:%s3] %v51
    %s54 = smul.addr 4, 5
    %s55 = scalar_lea.vmem %s0, %s54
    %v56 = vld [vmem:[%s55] sm:%s3]
    %s57 = scalar_lea.vmem [#allocation0], 40
    %58 = vst [vmem:[%s57] sm:%s3] %v56
    %s59 = smul.addr 4, 4
    %s60 = scalar_lea.vmem %s0, %s59
    %v61 = vld [vmem:[%s60] sm:%s3]
    %s62 = scalar_lea.vmem [#allocation0], 32
    %63 = vst [vmem:[%s62] sm:%s3] %v61
    %s64 = smul.addr 4, 3
    %s65 = scalar_lea.vmem %s0, %s64
    %v66 = vld [vmem:[%s65] sm:%s3]
    %s67 = scalar_lea.vmem [#allocation0], 24
    %68 = vst [vmem:[%s67] sm:%s3] %v66
    %s69 = smul.addr 4, 2
    %s70 = scalar_lea.vmem %s0, %s69
    %v71 = vld [vmem:[%s70] sm:%s3]
    %s72 = scalar_lea.vmem [#allocation0], 16
    %73 = vst [vmem:[%s72] sm:%s3] %v71
    %s74 = scalar_lea.vmem %s0, 4
    %v75 = vld [vmem:[%s74] sm:%s3]
    %s76 = scalar_lea.vmem [#allocation0], 8
    %77 = vst [vmem:[%s76] sm:%s3] %v75
    %v78 = vld [vmem:[%s0] sm:%s3]
    %79 = vst [vmem:[#allocation0] sm:%s3] %v78
    %v80 = vld [vmem:[#allocation0] ss:$8 sm:$0xf]
    %v81 = vld [vmem:[#allocation0] ss:$8 sm:$0xf0]
    %vm82 = vcmask 1047556
    %v83 = vsel %vm82, %v81, %v80
    %vm84 = vcmask 130048
    %85 = vst.msk [vmem:[%s1] sm:$0xff] %vm84, %v83
    %s86 = scalar_lea.vmem [#allocation0], 64
    %v87 = vld [vmem:[%s86] ss:$8 sm:$0xf]
    %s88 = scalar_lea.vmem [#allocation0], 64
    %v89 = vld [vmem:[%s88] ss:$8 sm:$0xf0]
    %vm90 = vcmask 1047556
    %v91 = vsel %vm90, %v89, %v87
    %vm92 = vcmask 130048
    %s93 = scalar_lea.vmem %s1, 8
    %94 = vst.msk [vmem:[%s93] sm:$0xff] %vm92, %v91
    %s95 = scalar_lea.vmem [#allocation0], 3
    %v96 = vld [vmem:[%s95] ss:$8 sm:$0xf]
    %s97 = scalar_lea.vmem [#allocation0], 3
    %v98 = vld [vmem:[%s97] ss:$8 sm:$0xf0]
    %vm99 = vcmask 1047556
    %v100 = vsel %vm99, %v98, %v96
    %101 = vrot.lane.b32.xlu0 %v100, 48
    %v102 = vpop.permute.xlu0 %101
    %vm103 = vcmask 523648
    %104 = vst.msk [vmem:[%s1] sm:$0xff] %vm103, %v102
    %s105 = scalar_lea.vmem [#allocation0], 67
    %v106 = vld [vmem:[%s105] ss:$8 sm:$0xf]
    %s107 = scalar_lea.vmem [#allocation0], 67
    %v108 = vld [vmem:[%s107] ss:$8 sm:$0xf0]
    %vm109 = vcmask 1047556
    %v110 = vsel %vm109, %v108, %v106
    %111 = vrot.lane.b32.xlu0 %v110, 48
    %v112 = vpop.permute.xlu0 %111
    %vm113 = vcmask 523648
    %s114 = scalar_lea.vmem %s1, 8
    %115 = vst.msk [vmem:[%s114] sm:$0xff] %vm113, %v112
    %s116 = scalar_lea.vmem [#allocation0], 2
    %v117 = vld [vmem:[%s116] ss:$8 sm:$0xf]
    %s118 = scalar_lea.vmem [#allocation0], 2
    %v119 = vld [vmem:[%s118] ss:$8 sm:$0xf0]
    %vm120 = vcmask 1047556
    %v121 = vsel %vm120, %v119, %v117
    %122 = vrot.lane.b32.xlu0 %v121, 32
    %v123 = vpop.permute.xlu0 %122
    %vm124 = vcmask 392448
    %125 = vst.msk [vmem:[%s1] sm:$0xff] %vm124, %v123
    %s126 = scalar_lea.vmem [#allocation0], 66
    %v127 = vld [vmem:[%s126] ss:$8 sm:$0xf]
    %s128 = scalar_lea.vmem [#allocation0], 66
    %v129 = vld [vmem:[%s128] ss:$8 sm:$0xf0]
    %vm130 = vcmask 1047556
    %v131 = vsel %vm130, %v129, %v127
    %132 = vrot.lane.b32.xlu0 %v131, 32
    %v133 = vpop.permute.xlu0 %132
    %vm134 = vcmask 392448
    %s135 = scalar_lea.vmem %s1, 8
    %136 = vst.msk [vmem:[%s135] sm:$0xff] %vm134, %v133
    %s137 = scalar_lea.vmem [#allocation0], 1
    %v138 = vld [vmem:[%s137] ss:$8 sm:$0xf]
    %s139 = scalar_lea.vmem [#allocation0], 1
    %v140 = vld [vmem:[%s139] ss:$8 sm:$0xf0]
    %vm141 = vcmask 1047556
    %v142 = vsel %vm141, %v140, %v138
    %143 = vrot.lane.b32.xlu0 %v142, 16
    %v144 = vpop.permute.xlu0 %143
    %vm145 = vcmask 261248
    %146 = vst.msk [vmem:[%s1] sm:$0xff] %vm145, %v144
    %s147 = scalar_lea.vmem [#allocation0], 65
    %v148 = vld [vmem:[%s147] ss:$8 sm:$0xf]
    %s149 = scalar_lea.vmem [#allocation0], 65
    %v150 = vld [vmem:[%s149] ss:$8 sm:$0xf0]
    %vm151 = vcmask 1047556
    %v152 = vsel %vm151, %v150, %v148
    %153 = vrot.lane.b32.xlu0 %v152, 16
    %v154 = vpop.permute.xlu0 %153
    %vm155 = vcmask 261248
    %s156 = scalar_lea.vmem %s1, 8
    %157 = vst.msk [vmem:[%s156] sm:$0xff] %vm155, %v154

// kernel: abrep_forward.1
$region0: #{abrep_forward.1}
  #allocation0 [shape = 'u32[]', space=smem, size = 0x4, offset = 0x4, fixed_abs, tag = 'smem constant byte address 0x4 - core index']
  #allocation1 [shape = 'u32[144,128]{1,0:T(1,128)}', space=vmem, size = 0x12000, scoped, tag = 'internal scratch']
  %s0 = inlined_call_operand.vmem [shape: f32[16,120], index: 0, kind: input, shape index: {}]
  %s1 = inlined_call_operand.vmem [shape: f32[64,96], index: 1, kind: input, shape index: {}]
  %s2 = inlined_call_operand.vmem [shape: f32[400,128], index: 2, kind: input, shape index: {}]
  %s3 = inlined_call_operand.hbm [shape: f32[16,32], index: 3, kind: output, shape index: {}]
  %s4 = sld [smem:[#allocation0]]
  $region22: #{abrep_forward.1} parent=0
    _
  %s6 = ssub.s32 1, %s4
  %s7 = scalar_select 0, %s6, %s4
  $region1: #{abrep_forward.1} parent=0
    #allocation2 [shape = 'u8[8192]{0}', space=vmem, size = 0x2000, scoped, tag = 'output window, operand 0, single buffered']
    #allocation3 [shape = 's32[1]{0}', space=sflag, size = 0x4, scoped, tag = 'scoped memory for abrep_forward.1']
    %8 = vsyncpa [#allocation3], 0
    // Predicated region
    $region2: #{abrep_forward.1} parent=1 // pred_check
      _
    $region3: #{abrep_forward.1} parent=1 // pred_check_branch
      %10 = sbr.rel (0) target = $region5
    $region4: #{abrep_forward.1} parent=1 // pred_region
      _
    $region5: #{abrep_forward.1} parent=1 // pred_fallthru
      _
    // Predicated region
    $region6: #{abrep_forward.1} parent=1 // pred_check
      _
    $region7: #{abrep_forward.1} parent=1 // pred_check_branch
      %12 = sbr.rel (0) target = $region9
    $region8: #{abrep_forward.1} parent=1 // pred_region
      _
    $region9: #{abrep_forward.1} parent=1 // pred_fallthru
      _
    // Predicated region
    $region10: #{abrep_forward.1} parent=1 // pred_check
      _
    $region11: #{abrep_forward.1} parent=1 // pred_check_branch
      %14 = sbr.rel (0) target = $region13
    $region12: #{abrep_forward.1} parent=1 // pred_region
      _
    $region13: #{abrep_forward.1} parent=1 // pred_fallthru
      _
    %v15 = vld [vmem:[%s1] sm:$0xff]
    %v16 = vld [vmem:[%s1 + $0x8] sm:$0xff]
    %v17 = vld [vmem:[%s1 + $0x10] sm:$0xff]
    %v18 = vld [vmem:[%s1 + $0x18] sm:$0xff]
    %v19 = vld [vmem:[%s1 + $0x20] sm:$0xff]
    %v20 = vld [vmem:[%s1 + $0x28] sm:$0xff]
    %v21 = vld [vmem:[%s1 + $0x30] sm:$0xff]
    %v22 = vld [vmem:[%s1 + $0x38] sm:$0xff]
    %v23 = vld [vmem:[%s0] sm:$0xff]
    %v24 = vld [vmem:[%s0 + $0x8] sm:$0xff]
    %v25 = vld [vmem:[%s2] sm:$0xff]
    %v26 = vld [vmem:[%s2 + $0x8] sm:$0xff]
    %v27 = vld [vmem:[%s2 + $0x10] sm:$0xff]
    %v28 = vld [vmem:[%s2 + $0x18] sm:$0xff]
    %v29 = vld [vmem:[%s2 + $0x20] sm:$0xff]
    %v30 = vld [vmem:[%s2 + $0x28] sm:$0xff]
    %v31 = vld [vmem:[%s2 + $0x30] sm:$0xff]
    %vm32 = vcmask 457728
    %v34 = vsel %vm32, %v23, 0
    %v37 = vsel %vm32, %v24, 0
    %39 = vmatprep.subr.mxu0 0.0
    %40 = vmatpush1.msra.mxu0 %v25
    %41 = vmatprep.subr.mxu0 0.0
    %42 = vmatpush1.msra.mxu0 %v26
    %43 = vmatprep.subr.mxu0 0.0
    %44 = vmatpush1.msra.mxu0 %v27
    %45 = vmatprep.subr.mxu0 0.0
    %46 = vmatpush1.msra.mxu0 %v28
    %47 = vmatprep.subr.mxu0 0.0
    %48 = vmatpush1.msra.mxu0 %v29
    %49 = vmatprep.subr.mxu0 0.0
    %50 = vmatpush1.msra.mxu0 %v30
    %51 = vmatprep.subr.mxu0 0.0
    %52 = vmatpush1.msra.mxu0 %v31
    %53 = vmatprep.subr.mxu0 0.0
    %54 = vmatpush1.msra.mxu0 0.0
    %55 = vmatprep.subr.mxu0 0.0
    %56 = vmatpush1.msra.mxu0 0.0
    %57 = vmatprep.subr.mxu0 0.0
    %58 = vmatpush1.msra.mxu0 0.0
    %59 = vmatprep.subr.mxu0 0.0
    %60 = vmatpush1.msra.mxu0 0.0
    %61 = vmatprep.subr.mxu0 0.0
    %62 = vmatpush1.msra.mxu0 0.0
    %63 = vmatprep.subr.mxu0 0.0
    %64 = vmatpush1.msra.mxu0 0.0
    %65 = vmatprep.subr.mxu0 0.0
    %66 = vmatpush1.msra.mxu0 0.0
    %67 = vmatprep.subr.mxu0 0.0
    %68 = vmatpush1.msra.mxu0 0.0
    %69 = vmatprep.subr.mxu0 0.0
    %70 = vmatpush1.msra.mxu0 0.0
    %71 = vmatprep.subr.mxu0 0.0
    %72 = vmatpush1.msra.mxu0 0.0
    %73 = vmatprep.subr.mxu0 0.0
    %74 = vmatpush1.msra.mxu0 0.0
    %75 = vmatprep.subr.mxu0 0.0
    %76 = vmatpush1.msra.mxu0 0.0
    %77 = vmatprep.subr.mxu0 0.0
    %78 = vmatpush1.msra.mxu0 0.0
    %79 = vmatprep.subr.mxu0 0.0
    %80 = vmatpush1.msra.mxu0 0.0
    %81 = vmatprep.subr.mxu0 0.0
    %82 = vmatpush1.msra.mxu0 0.0
    %83 = vmatprep.subr.mxu0 0.0
    %84 = vmatpush1.msra.mxu0 0.0
    %85 = vmatprep.subr.mxu0 0.0
    %86 = vmatpush1.msra.mxu0 0.0
    %87 = vmatprep.subr.mxu0 0.0
    %88 = vmatpush1.msra.mxu0 0.0
    %89 = vmatprep.subr.mxu0 0.0
    %90 = vmatpush1.msra.mxu0 0.0
    %91 = vmatprep.subr.mxu0 0.0
    %92 = vmatpush1.msra.mxu0 0.0
    %93 = vmatprep.subr.mxu0 0.0
    %94 = vmatpush1.msra.mxu0 0.0
    %95 = vmatprep.subr.mxu0 0.0
    %96 = vmatpush1.msra.mxu0 0.0
    %97 = vmatprep.subr.mxu0 0.0
    %98 = vmatpush1.msra.mxu0 0.0
    %99 = vmatprep.subr.mxu0 0.0
    %100 = vmatpush1.msra.mxu0 0.0
    %101 = vmatprep.subr.mxu0 0.0
    %102 = vmatpush1.msra.mxu0 0.0
    %103 = vmatprep.mubr.f32.mxu0 0.0
    %104 = vmatmul.mubr.f32.gmra.mrb[0].mxu0 %v34
    %v105 = vpop.f32.mrb[0].mxu0
    %v106 = vadd.f32 0.0, %v105
    %v107 = vpop.f32.mrb[0].mxu0
    %108 = vmatprep.mubr.f32.mxu0 0.0
    %109 = vmatmul.mubr.f32.gmra.mrb[0].mxu0 %v37
    %v110 = vpop.f32.mrb[0].mxu0
    %v111 = vadd.f32 0.0, %v110
    %v112 = vpop.f32.mrb[0].mxu0
    %113 = vdwg.mxu0
    %v114 = vld [vmem:[%s2 + $0x38] sm:$0x1]
    %v115 = vld [vmem:[%s2 + $0x39] sm:$0x1]
    %vm116 = vcmask 261120
    %v117 = vsel %vm116, %v106, 0.0
    %118 = vadd.xlane.f32.xlu0 %v117
    %v119 = vpop.xlane.xlu0 %118
    %v120 = vsel %vm116, %v111, 0.0
    %121 = vadd.xlane.f32.xlu0 %v120
    %v122 = vpop.xlane.xlu0 %121
    %v123 = vrcp.pop 32.0
    %v124 = vmul.f32 %v119, %v123
    %v125 = vmul.f32 %v122, %v123
    %v126 = vsub.f32 %v106, %v124
    %v127 = vsub.f32 %v111, %v125
    %v128 = vmul.f32 %v126, %v126
    %v129 = vmul.f32 %v127, %v127
    %v130 = vsel %vm116, %v128, 0.0
    %131 = vadd.xlane.f32.xlu0 %v130
    %v132 = vpop.xlane.xlu0 %131
    %v133 = vsel %vm116, %v129, 0.0
    %134 = vadd.xlane.f32.xlu0 %v133
    %v135 = vpop.xlane.xlu0 %134
    %v136 = vmul.f32 %v132, %v123
    %v137 = vmul.f32 %v135, %v123
    %v138 = vadd.f32 %v136, 1e-12
    %v139 = vadd.f32 %v137, 1e-12
    %v140 = vrsqrt.pop %v138
    %v141 = vrsqrt.pop %v139
    %v142 = vmul.f32 %v126, %v140
    %v143 = vmul.f32 %v127, %v141
    %v144 = vlaneseq
    %v145 = vshrl.u32 %v144, 7
    %v146 = vsub.s32 0, %v145
    %v147 = vrot.slane %v114, %v146
    %v148 = vmul.f32 %v142, %v147
    %v149 = vmul.f32 %v143, %v147
    %v150 = vlaneseq
    %v151 = vshrl.u32 %v150, 7
    %v152 = vsub.s32 0, %v151
    %v153 = vrot.slane %v115, %v152
    %v154 = vadd.f32 %v148, %v153
    %v155 = vadd.f32 %v149, %v153
    %v156 = vld [vmem:[%s2 + $0x40] sm:$0xff]
    %v157 = vld [vmem:[%s2 + $0x48] sm:$0xff]
    %v158 = vld [vmem:[%s2 + $0x50] sm:$0xff]
    %v159 = vld [vmem:[%s2 + $0x58] sm:$0xff]
    %v160 = vld [vmem:[%s2 + $0x60] sm:$0xff]
    %v161 = vld [vmem:[%s2 + $0x68] sm:$0xff]
    %v162 = vld [vmem:[%s2 + $0x70] sm:$0xff]
    %v163 = vld [vmem:[%s2 + $0x78] sm:$0xff]
    %v164 = vld [vmem:[%s2 + $0x80] sm:$0xff]
    %v165 = vld [vmem:[%s2 + $0x88] sm:$0xff]
    %v166 = vld [vmem:[%s2 + $0x90] sm:$0xff]
    %v167 = vld [vmem:[%s2 + $0x98] sm:$0xff]
    %v168 = vld [vmem:[%s2 + $0xa0] sm:$0xff]
    %v169 = vld [vmem:[%s2 + $0xa8] sm:$0xff]
    %v170 = vld [vmem:[%s2 + $0xb0] sm:$0xff]
    %v171 = vld [vmem:[%s2 + $0xb8] sm:$0xff]
    %v172 = vld [vmem:[%s2 + $0xc0] sm:$0xff]
    %v173 = vld [vmem:[%s2 + $0xc8] sm:$0xff]
    %v174 = vld [vmem:[%s2 + $0xd0] sm:$0xff]
    %v175 = vld [vmem:[%s2 + $0xd8] sm:$0xff]
    %v176 = vld [vmem:[%s2 + $0xe0] sm:$0x1]
    %v177 = vld [vmem:[%s2 + $0xe1] sm:$0x1]
    %v178 = vld [vmem:[%s2 + $0xe2] sm:$0x1]
    %v179 = vld [vmem:[%s2 + $0xe3] sm:$0x1]
    %v180 = vld [vmem:[%s2 + $0xe4] sm:$0x1]
    %v181 = vld [vmem:[%s2 + $0xe5] sm:$0x1]
    %v182 = vld [vmem:[%s2 + $0xe6] sm:$0x1]
    %v183 = vld [vmem:[%s2 + $0xe7] sm:$0x1]
    %v184 = vlaneseq
    %v185 = vshrl.u32 %v184, 7
    %v186 = vsub.s32 0, %v185
    %v187 = vrot.slane %v176, %v186
    %v189 = vsel %vm116, %v154, 0
    %v192 = vsel %vm116, %v155, 0
    %194 = vmatprep.subr.mxu0 0.0
    %195 = vmatpush1.msra.mxu0 %v156
    %196 = vmatprep.subr.mxu0 0.0
    %197 = vmatpush1.msra.mxu0 %v157
    %198 = vmatprep.subr.mxu0 0.0
    %199 = vmatpush1.msra.mxu0 %v158
    %200 = vmatprep.subr.mxu0 0.0
    %201 = vmatpush1.msra.mxu0 %v159
    %202 = vmatprep.subr.mxu0 0.0
    %203 = vmatpush1.msra.mxu0 0.0
    %204 = vmatprep.subr.mxu0 0.0
    %205 = vmatpush1.msra.mxu0 0.0
    %206 = vmatprep.subr.mxu0 0.0
    %207 = vmatpush1.msra.mxu0 0.0
    %208 = vmatprep.subr.mxu0 0.0
    %209 = vmatpush1.msra.mxu0 0.0
    %210 = vmatprep.subr.mxu0 0.0
    %211 = vmatpush1.msra.mxu0 0.0
    %212 = vmatprep.subr.mxu0 0.0
    %213 = vmatpush1.msra.mxu0 0.0
    %214 = vmatprep.subr.mxu0 0.0
    %215 = vmatpush1.msra.mxu0 0.0
    %216 = vmatprep.subr.mxu0 0.0
    %217 = vmatpush1.msra.mxu0 0.0
    %218 = vmatprep.subr.mxu0 0.0
    %219 = vmatpush1.msra.mxu0 0.0
    %220 = vmatprep.subr.mxu0 0.0
    %221 = vmatpush1.msra.mxu0 0.0
    %222 = vmatprep.subr.mxu0 0.0
    %223 = vmatpush1.msra.mxu0 0.0
    %224 = vmatprep.subr.mxu0 0.0
    %225 = vmatpush1.msra.mxu0 0.0
    %226 = vmatprep.subr.mxu0 0.0
    %227 = vmatpush1.msra.mxu0 0.0
    %228 = vmatprep.subr.mxu0 0.0
    %229 = vmatpush1.msra.mxu0 0.0
    %230 = vmatprep.subr.mxu0 0.0
    %231 = vmatpush1.msra.mxu0 0.0
    %232 = vmatprep.subr.mxu0 0.0
    %233 = vmatpush1.msra.mxu0 0.0
    %234 = vmatprep.subr.mxu0 0.0
    %235 = vmatpush1.msra.mxu0 0.0
    %236 = vmatprep.subr.mxu0 0.0
    %237 = vmatpush1.msra.mxu0 0.0
    %238 = vmatprep.subr.mxu0 0.0
    %239 = vmatpush1.msra.mxu0 0.0
    %240 = vmatprep.subr.mxu0 0.0
    %241 = vmatpush1.msra.mxu0 0.0
    %242 = vmatprep.subr.mxu0 0.0
    %243 = vmatpush1.msra.mxu0 0.0
    %244 = vmatprep.subr.mxu0 0.0
    %245 = vmatpush1.msra.mxu0 0.0
    %246 = vmatprep.subr.mxu0 0.0
    %247 = vmatpush1.msra.mxu0 0.0
    %248 = vmatprep.subr.mxu0 0.0
    %249 = vmatpush1.msra.mxu0 0.0
    %250 = vmatprep.subr.mxu0 0.0
    %251 = vmatpush1.msra.mxu0 0.0
    %252 = vmatprep.subr.mxu0 0.0
    %253 = vmatpush1.msra.mxu0 0.0
    %254 = vmatprep.subr.mxu0 0.0
    %255 = vmatpush1.msra.mxu0 0.0
    %256 = vmatprep.subr.mxu0 0.0
    %257 = vmatpush1.msra.mxu0 0.0
    %258 = vmatprep.mubr.f32.mxu0 0.0
    %259 = vmatmul.mubr.f32.gmra.mrb[0].mxu0 %v189
    %v260 = vpop.f32.mrb[0].mxu0
    %v261 = vadd.f32 %v187, %v260
    %v262 = vpop.f32.mrb[0].mxu0
    %263 = vmatprep.mubr.f32.mxu0 0.0
    %264 = vmatmul.mubr.f32.gmra.mrb[0].mxu0 %v192
    %v265 = vpop.f32.mrb[0].mxu0
    %v266 = vadd.f32 %v187, %v265
    %v267 = vpop.f32.mrb[0].mxu0
    %268 = vdwg.mxu0
    %277 = vrot.lane.b32.xlu0 %v15, 32
    %v278 = vpop.permute.xlu0 %277
    %279 = vrot.lane.b32.xlu0 %v16, 32
    %v280 = vpop.permute.xlu0 %279
    %281 = vrot.lane.b32.xlu0 %v17, 32
    %v282 = vpop.permute.xlu0 %281
    %283 = vrot.lane.b32.xlu0 %v18, 32
    %v284 = vpop.permute.xlu0 %283
    %285 = vrot.lane.b32.xlu0 %v19, 32
    %v286 = vpop.permute.xlu0 %285
    %287 = vrot.lane.b32.xlu0 %v20, 32
    %v288 = vpop.permute.xlu0 %287
    %289 = vrot.lane.b32.xlu0 %v21, 32
    %v290 = vpop.permute.xlu0 %289
    %291 = vrot.lane.b32.xlu0 %v22, 32
    %v292 = vpop.permute.xlu0 %291
    %v301 = vmul.f32 %v261, %v278
    %v302 = vmul.f32 %v266, %v280
    %v303 = vmul.f32 %v261, %v282
    %v304 = vmul.f32 %v266, %v284
    %v305 = vmul.f32 %v261, %v286
    %v306 = vmul.f32 %v266, %v288
    %v307 = vmul.f32 %v261, %v290
    %v308 = vmul.f32 %v266, %v292
    %309 = vrot.lane.b32.xlu0 %v15, 64
    %v310 = vpop.permute.xlu0 %309
    %311 = vrot.lane.b32.xlu0 %v16, 64
    %v312 = vpop.permute.xlu0 %311
    %313 = vrot.lane.b32.xlu0 %v17, 64
    %v314 = vpop.permute.xlu0 %313
    %315 = vrot.lane.b32.xlu0 %v18, 64
    %v316 = vpop.permute.xlu0 %315
    %317 = vrot.lane.b32.xlu0 %v19, 64
    %v318 = vpop.permute.xlu0 %317
    %319 = vrot.lane.b32.xlu0 %v20, 64
    %v320 = vpop.permute.xlu0 %319
    %321 = vrot.lane.b32.xlu0 %v21, 64
    %v322 = vpop.permute.xlu0 %321
    %323 = vrot.lane.b32.xlu0 %v22, 64
    %v324 = vpop.permute.xlu0 %323
    %v333 = vmul.f32 %v261, %v310
    %v334 = vmul.f32 %v266, %v312
    %v335 = vmul.f32 %v261, %v314
    %v336 = vmul.f32 %v266, %v316
    %v337 = vmul.f32 %v261, %v318
    %v338 = vmul.f32 %v266, %v320
    %v339 = vmul.f32 %v261, %v322
    %v340 = vmul.f32 %v266, %v324
    %349 = vrot.lane.b32.xlu0 %v301, 96
    %v350 = vpop.permute.xlu0 %349
    %351 = vrot.lane.b32.xlu0 %v302, 96
    %v352 = vpop.permute.xlu0 %351
    %353 = vrot.lane.b32.xlu0 %v303, 96
    %v354 = vpop.permute.xlu0 %353
    %355 = vrot.lane.b32.xlu0 %v304, 96
    %v356 = vpop.permute.xlu0 %355
    %357 = vrot.lane.b32.xlu0 %v305, 96
    %v358 = vpop.permute.xlu0 %357
    %359 = vrot.lane.b32.xlu0 %v306, 96
    %v360 = vpop.permute.xlu0 %359
    %361 = vrot.lane.b32.xlu0 %v307, 96
    %v362 = vpop.permute.xlu0 %361
    %363 = vrot.lane.b32.xlu0 %v308, 96
    %v364 = vpop.permute.xlu0 %363
    %v366 = vsel %vm116, %v261, 0
    %v369 = vsel %vm116, %v266, 0
    %v371 = vsel %vm116, %v350, 0
    %v373 = vsel %vm116, %v352, 0
    %v375 = vsel %vm116, %v354, 0
    %v377 = vsel %vm116, %v356, 0
    %v379 = vsel %vm116, %v358, 0
    %v381 = vsel %vm116, %v360, 0
    %v383 = vsel %vm116, %v362, 0
    %v385 = vsel %vm116, %v364, 0
    %387 = vmatprep.subr.mxu0 0.0
    %388 = vmatpush1.xpose.msra.mxu0 %v371
    %389 = vmatprep.subr.mxu0 0.0
    %390 = vmatpush1.xpose.msra.mxu0 %v373
    %391 = vmatprep.subr.mxu0 0.0
    %392 = vmatpush1.xpose.msra.mxu0 %v375
    %393 = vmatprep.subr.mxu0 0.0
    %394 = vmatpush1.xpose.msra.mxu0 %v377
    %395 = vmatprep.subr.mxu0 0.0
    %396 = vmatpush1.xpose.msra.mxu0 %v379
    %397 = vmatprep.subr.mxu0 0.0
    %398 = vmatpush1.xpose.msra.mxu0 %v381
    %399 = vmatprep.subr.mxu0 0.0
    %400 = vmatpush1.xpose.msra.mxu0 %v383
    %401 = vmatprep.subr.mxu0 0.0
    %402 = vmatpush1.xpose.msra.mxu0 %v385
    %403 = vmatprep.subr.mxu0 0.0
    %404 = vmatpush1.xpose.msra.mxu0 0.0
    %405 = vmatprep.subr.mxu0 0.0
    %406 = vmatpush1.xpose.msra.mxu0 0.0
    %407 = vmatprep.subr.mxu0 0.0
    %408 = vmatpush1.xpose.msra.mxu0 0.0
    %409 = vmatprep.subr.mxu0 0.0
    %410 = vmatpush1.xpose.msra.mxu0 0.0
    %411 = vmatprep.subr.mxu0 0.0
    %412 = vmatpush1.xpose.msra.mxu0 0.0
    %413 = vmatprep.subr.mxu0 0.0
    %414 = vmatpush1.xpose.msra.mxu0 0.0
    %415 = vmatprep.subr.mxu0 0.0
    %416 = vmatpush1.xpose.msra.mxu0 0.0
    %417 = vmatprep.subr.mxu0 0.0
    %418 = vmatpush1.xpose.msra.mxu0 0.0
    %419 = vmatprep.subr.mxu0 0.0
    %420 = vmatpush1.xpose.msra.mxu0 0.0
    %421 = vmatprep.subr.mxu0 0.0
    %422 = vmatpush1.xpose.msra.mxu0 0.0
    %423 = vmatprep.subr.mxu0 0.0
    %424 = vmatpush1.xpose.msra.mxu0 0.0
    %425 = vmatprep.subr.mxu0 0.0
    %426 = vmatpush1.xpose.msra.mxu0 0.0
    %427 = vmatprep.subr.mxu0 0.0
    %428 = vmatpush1.xpose.msra.mxu0 0.0
    %429 = vmatprep.subr.mxu0 0.0
    %430 = vmatpush1.xpose.msra.mxu0 0.0
    %431 = vmatprep.subr.mxu0 0.0
    %432 = vmatpush1.xpose.msra.mxu0 0.0
    %433 = vmatprep.subr.mxu0 0.0
    %434 = vmatpush1.xpose.msra.mxu0 0.0
    %435 = vmatprep.subr.mxu0 0.0
    %436 = vmatpush1.xpose.msra.mxu0 0.0
    %437 = vmatprep.subr.mxu0 0.0
    %438 = vmatpush1.xpose.msra.mxu0 0.0
    %439 = vmatprep.subr.mxu0 0.0
    %440 = vmatpush1.xpose.msra.mxu0 0.0
    %441 = vmatprep.subr.mxu0 0.0
    %442 = vmatpush1.xpose.msra.mxu0 0.0
    %443 = vmatprep.subr.mxu0 0.0
    %444 = vmatpush1.xpose.msra.mxu0 0.0
    %445 = vmatprep.subr.mxu0 0.0
    %446 = vmatpush1.xpose.msra.mxu0 0.0
    %447 = vmatprep.subr.mxu0 0.0
    %448 = vmatpush1.xpose.msra.mxu0 0.0
    %449 = vmatprep.subr.mxu0 0.0
    %450 = vmatpush1.xpose.msra.mxu0 0.0
    %451 = vmatprep.mubr.f32.mxu0 0.0
    %452 = vmatmul.mubr.f32.gmra.mrb[0].mxu0 %v366
    %v453 = vpop.f32.mrb[0].mxu0
    %v454 = vadd.f32 0.0, %v453
    %v455 = vpop.f32.mrb[0].mxu0
    %456 = vmatprep.mubr.f32.mxu0 0.0
    %457 = vmatmul.mubr.f32.gmra.mrb[0].mxu0 %v369
    %v458 = vpop.f32.mrb[0].mxu0
    %v459 = vadd.f32 0.0, %v458
    %v460 = vpop.f32.mrb[0].mxu0
    %461 = vdwg.mxu0
    %v462 = vmul.f32 %v454, 0.35355338
    %v463 = vmul.f32 %v459, 0.35355338
    %464 = vrot.lane.b32.xlu0 %v23, 72
    %v465 = vpop.permute.xlu0 %464
    %466 = vrot.lane.b32.xlu0 %v24, 72
    %v467 = vpop.permute.xlu0 %466
    %v470 = vadd.f32 %v462, %v465
    %v471 = vadd.f32 %v463, %v467
    %vm472 = vcmask 523264
    %v473 = vsel %vm472, %v470, -inf
    %474 = vmax.xlane.f32.xlu0 %v473
    %v475 = vpop.xlane.xlu0 %474
    %v476 = vsel %vm472, %v471, -inf
    %477 = vmax.xlane.f32.xlu0 %v476
    %v478 = vpop.xlane.xlu0 %477
    %v479 = vsub.f32 %v470, %v475
    %v480 = vsub.f32 %v471, %v478
    %v481 = vmul.f32 %v479, 1.442695
    %v482 = vpow.pop %v481
    %v483 = vmul.f32 %v480, 1.442695
    %v484 = vpow.pop %v483
    %485 = vrot.lane.b32.xlu0 %v15, 96
    %v486 = vpop.permute.xlu0 %485
    %487 = vrot.lane.b32.xlu0 %v16, 96
    %v488 = vpop.permute.xlu0 %487
    %489 = vrot.lane.b32.xlu0 %v17, 96
    %v490 = vpop.permute.xlu0 %489
    %491 = vrot.lane.b32.xlu0 %v18, 96
    %v492 = vpop.permute.xlu0 %491
    %493 = vrot.lane.b32.xlu0 %v19, 96
    %v494 = vpop.permute.xlu0 %493
    %495 = vrot.lane.b32.xlu0 %v20, 96
    %v496 = vpop.permute.xlu0 %495
    %497 = vrot.lane.b32.xlu0 %v21, 96
    %v498 = vpop.permute.xlu0 %497
    %499 = vrot.lane.b32.xlu0 %v22, 96
    %v500 = vpop.permute.xlu0 %499
    %v510 = vsel %vm472, %v482, 0
    %v513 = vsel %vm472, %v484, 0
    %515 = vmatprep.subr.mxu0 0.0
    %516 = vmatpush1.msra.mxu0 %v486
    %517 = vmatprep.subr.mxu0 0.0
    %518 = vmatpush1.msra.mxu0 %v488
    %519 = vmatprep.subr.mxu0 0.0
    %520 = vmatpush1.msra.mxu0 %v490
    %521 = vmatprep.subr.mxu0 0.0
    %522 = vmatpush1.msra.mxu0 %v492
    %523 = vmatprep.subr.mxu0 0.0
    %524 = vmatpush1.msra.mxu0 %v494
    %525 = vmatprep.subr.mxu0 0.0
    %526 = vmatpush1.msra.mxu0 %v496
    %527 = vmatprep.subr.mxu0 0.0
    %528 = vmatpush1.msra.mxu0 %v498
    %529 = vmatprep.subr.mxu0 0.0
    %530 = vmatpush1.msra.mxu0 %v500
    %531 = vmatprep.subr.mxu0 0.0
    %532 = vmatpush1.msra.mxu0 0.0
    %533 = vmatprep.subr.mxu0 0.0
    %534 = vmatpush1.msra.mxu0 0.0
    %535 = vmatprep.subr.mxu0 0.0
    %536 = vmatpush1.msra.mxu0 0.0
    %537 = vmatprep.subr.mxu0 0.0
    %538 = vmatpush1.msra.mxu0 0.0
    %539 = vmatprep.subr.mxu0 0.0
    %540 = vmatpush1.msra.mxu0 0.0
    %541 = vmatprep.subr.mxu0 0.0
    %542 = vmatpush1.msra.mxu0 0.0
    %543 = vmatprep.subr.mxu0 0.0
    %544 = vmatpush1.msra.mxu0 0.0
    %545 = vmatprep.subr.mxu0 0.0
    %546 = vmatpush1.msra.mxu0 0.0
    %547 = vmatprep.subr.mxu0 0.0
    %548 = vmatpush1.msra.mxu0 0.0
    %549 = vmatprep.subr.mxu0 0.0
    %550 = vmatpush1.msra.mxu0 0.0
    %551 = vmatprep.subr.mxu0 0.0
    %552 = vmatpush1.msra.mxu0 0.0
    %553 = vmatprep.subr.mxu0 0.0
    %554 = vmatpush1.msra.mxu0 0.0
    %555 = vmatprep.subr.mxu0 0.0
    %556 = vmatpush1.msra.mxu0 0.0
    %557 = vmatprep.subr.mxu0 0.0
    %558 = vmatpush1.msra.mxu0 0.0
    %559 = vmatprep.subr.mxu0 0.0
    %560 = vmatpush1.msra.mxu0 0.0
    %561 = vmatprep.subr.mxu0 0.0
    %562 = vmatpush1.msra.mxu0 0.0
    %563 = vmatprep.subr.mxu0 0.0
    %564 = vmatpush1.msra.mxu0 0.0
    %565 = vmatprep.subr.mxu0 0.0
    %566 = vmatpush1.msra.mxu0 0.0
    %567 = vmatprep.subr.mxu0 0.0
    %568 = vmatpush1.msra.mxu0 0.0
    %569 = vmatprep.subr.mxu0 0.0
    %570 = vmatpush1.msra.mxu0 0.0
    %571 = vmatprep.subr.mxu0 0.0
    %572 = vmatpush1.msra.mxu0 0.0
    %573 = vmatprep.subr.mxu0 0.0
    %574 = vmatpush1.msra.mxu0 0.0
    %575 = vmatprep.subr.mxu0 0.0
    %576 = vmatpush1.msra.mxu0 0.0
    %577 = vmatprep.subr.mxu0 0.0
    %578 = vmatpush1.msra.mxu0 0.0
    %579 = vmatprep.mubr.f32.mxu0 0.0
    %580 = vmatmul.mubr.f32.gmra.mrb[0].mxu0 %v510
    %v581 = vpop.f32.mrb[0].mxu0
    %v582 = vadd.f32 0.0, %v581
    %v583 = vpop.f32.mrb[0].mxu0
    %584 = vmatprep.mubr.f32.mxu0 0.0
    %585 = vmatmul.mubr.f32.gmra.mrb[0].mxu0 %v513
    %v586 = vpop.f32.mrb[0].mxu0
    %v587 = vadd.f32 0.0, %v586
    %v588 = vpop.f32.mrb[0].mxu0
    %589 = vdwg.mxu0
    %v590 = vrcp.pop %v582
    %v591 = vmul.f32 %v482, %v590
    %v592 = vrcp.pop %v587
    %v593 = vmul.f32 %v484, %v592
    %602 = vrot.lane.b32.xlu0 %v333, 64
    %v603 = vpop.permute.xlu0 %602
    %604 = vrot.lane.b32.xlu0 %v334, 64
    %v605 = vpop.permute.xlu0 %604
    %606 = vrot.lane.b32.xlu0 %v335, 64
    %v607 = vpop.permute.xlu0 %606
    %608 = vrot.lane.b32.xlu0 %v336, 64
    %v609 = vpop.permute.xlu0 %608
    %610 = vrot.lane.b32.xlu0 %v337, 64
    %v611 = vpop.permute.xlu0 %610
    %612 = vrot.lane.b32.xlu0 %v338, 64
    %v613 = vpop.permute.xlu0 %612
    %614 = vrot.lane.b32.xlu0 %v339, 64
    %v615 = vpop.permute.xlu0 %614
    %616 = vrot.lane.b32.xlu0 %v340, 64
    %v617 = vpop.permute.xlu0 %616
    %v627 = vsel %vm472, %v591, 0
    %v630 = vsel %vm472, %v593, 0
    %632 = vmatprep.subr.mxu0 0.0
    %633 = vmatpush1.msra.mxu0 %v603
    %634 = vmatprep.subr.mxu0 0.0
    %635 = vmatpush1.msra.mxu0 %v605
    %636 = vmatprep.subr.mxu0 0.0
    %637 = vmatpush1.msra.mxu0 %v607
    %638 = vmatprep.subr.mxu0 0.0
    %639 = vmatpush1.msra.mxu0 %v609
    %640 = vmatprep.subr.mxu0 0.0
    %641 = vmatpush1.msra.mxu0 %v611
    %642 = vmatprep.subr.mxu0 0.0
    %643 = vmatpush1.msra.mxu0 %v613
    %644 = vmatprep.subr.mxu0 0.0
    %645 = vmatpush1.msra.mxu0 %v615
    %646 = vmatprep.subr.mxu0 0.0
    %647 = vmatpush1.msra.mxu0 %v617
    %648 = vmatprep.subr.mxu0 0.0
    %649 = vmatpush1.msra.mxu0 0.0
    %650 = vmatprep.subr.mxu0 0.0
    %651 = vmatpush1.msra.mxu0 0.0
    %652 = vmatprep.subr.mxu0 0.0
    %653 = vmatpush1.msra.mxu0 0.0
    %654 = vmatprep.subr.mxu0 0.0
    %655 = vmatpush1.msra.mxu0 0.0
    %656 = vmatprep.subr.mxu0 0.0
    %657 = vmatpush1.msra.mxu0 0.0
    %658 = vmatprep.subr.mxu0 0.0
    %659 = vmatpush1.msra.mxu0 0.0
    %660 = vmatprep.subr.mxu0 0.0
    %661 = vmatpush1.msra.mxu0 0.0
    %662 = vmatprep.subr.mxu0 0.0
    %663 = vmatpush1.msra.mxu0 0.0
    %664 = vmatprep.subr.mxu0 0.0
    %665 = vmatpush1.msra.mxu0 0.0
    %666 = vmatprep.subr.mxu0 0.0
    %667 = vmatpush1.msra.mxu0 0.0
    %668 = vmatprep.subr.mxu0 0.0
    %669 = vmatpush1.msra.mxu0 0.0
    %670 = vmatprep.subr.mxu0 0.0
    %671 = vmatpush1.msra.mxu0 0.0
    %672 = vmatprep.subr.mxu0 0.0
    %673 = vmatpush1.msra.mxu0 0.0
    %674 = vmatprep.subr.mxu0 0.0
    %675 = vmatpush1.msra.mxu0 0.0
    %676 = vmatprep.subr.mxu0 0.0
    %677 = vmatpush1.msra.mxu0 0.0
    %678 = vmatprep.subr.mxu0 0.0
    %679 = vmatpush1.msra.mxu0 0.0
    %680 = vmatprep.subr.mxu0 0.0
    %681 = vmatpush1.msra.mxu0 0.0
    %682 = vmatprep.subr.mxu0 0.0
    %683 = vmatpush1.msra.mxu0 0.0
    %684 = vmatprep.subr.mxu0 0.0
    %685 = vmatpush1.msra.mxu0 0.0
    %686 = vmatprep.subr.mxu0 0.0
    %687 = vmatpush1.msra.mxu0 0.0
    %688 = vmatprep.subr.mxu0 0.0
    %689 = vmatpush1.msra.mxu0 0.0
    %690 = vmatprep.subr.mxu0 0.0
    %691 = vmatpush1.msra.mxu0 0.0
    %692 = vmatprep.subr.mxu0 0.0
    %693 = vmatpush1.msra.mxu0 0.0
    %694 = vmatprep.subr.mxu0 0.0
    %695 = vmatpush1.msra.mxu0 0.0
    %696 = vmatprep.mubr.f32.mxu0 0.0
    %697 = vmatmul.mubr.f32.gmra.mrb[0].mxu0 %v627
    %v698 = vpop.f32.mrb[0].mxu0
    %v699 = vadd.f32 0.0, %v698
    %v700 = vpop.f32.mrb[0].mxu0
    %701 = vmatprep.mubr.f32.mxu0 0.0
    %702 = vmatmul.mubr.f32.gmra.mrb[0].mxu0 %v630
    %v703 = vpop.f32.mrb[0].mxu0
    %v704 = vadd.f32 0.0, %v703
    %v705 = vpop.f32.mrb[0].mxu0
    %706 = vdwg.mxu0
    %v707 = vlaneseq
    %v708 = vshrl.u32 %v707, 7
    %v709 = vsub.s32 0, %v708
    %v710 = vrot.slane %v177, %v709
    %v712 = vsel %vm116, %v699, 0
    %v715 = vsel %vm116, %v704, 0
    %717 = vmatprep.subr.mxu0 0.0
    %718 = vmatpush1.msra.mxu0 %v160
    %719 = vmatprep.subr.mxu0 0.0
    %720 = vmatpush1.msra.mxu0 %v161
    %721 = vmatprep.subr.mxu0 0.0
    %722 = vmatpush1.msra.mxu0 %v162
    %723 = vmatprep.subr.mxu0 0.0
    %724 = vmatpush1.msra.mxu0 %v163
    %725 = vmatprep.subr.mxu0 0.0
    %726 = vmatpush1.msra.mxu0 0.0
    %727 = vmatprep.subr.mxu0 0.0
    %728 = vmatpush1.msra.mxu0 0.0
    %729 = vmatprep.subr.mxu0 0.0
    %730 = vmatpush1.msra.mxu0 0.0
    %731 = vmatprep.subr.mxu0 0.0
    %732 = vmatpush1.msra.mxu0 0.0
    %733 = vmatprep.subr.mxu0 0.0
    %734 = vmatpush1.msra.mxu0 0.0
    %735 = vmatprep.subr.mxu0 0.0
    %736 = vmatpush1.msra.mxu0 0.0
    %737 = vmatprep.subr.mxu0 0.0
    %738 = vmatpush1.msra.mxu0 0.0
    %739 = vmatprep.subr.mxu0 0.0
    %740 = vmatpush1.msra.mxu0 0.0
    %741 = vmatprep.subr.mxu0 0.0
    %742 = vmatpush1.msra.mxu0 0.0
    %743 = vmatprep.subr.mxu0 0.0
    %744 = vmatpush1.msra.mxu0 0.0
    %745 = vmatprep.subr.mxu0 0.0
    %746 = vmatpush1.msra.mxu0 0.0
    %747 = vmatprep.subr.mxu0 0.0
    %748 = vmatpush1.msra.mxu0 0.0
    %749 = vmatprep.subr.mxu0 0.0
    %750 = vmatpush1.msra.mxu0 0.0
    %751 = vmatprep.subr.mxu0 0.0
    %752 = vmatpush1.msra.mxu0 0.0
    %753 = vmatprep.subr.mxu0 0.0
    %754 = vmatpush1.msra.mxu0 0.0
    %755 = vmatprep.subr.mxu0 0.0
    %756 = vmatpush1.msra.mxu0 0.0
    %757 = vmatprep.subr.mxu0 0.0
    %758 = vmatpush1.msra.mxu0 0.0
    %759 = vmatprep.subr.mxu0 0.0
    %760 = vmatpush1.msra.mxu0 0.0
    %761 = vmatprep.subr.mxu0 0.0
    %762 = vmatpush1.msra.mxu0 0.0
    %763 = vmatprep.subr.mxu0 0.0
    %764 = vmatpush1.msra.mxu0 0.0
    %765 = vmatprep.subr.mxu0 0.0
    %766 = vmatpush1.msra.mxu0 0.0
    %767 = vmatprep.subr.mxu0 0.0
    %768 = vmatpush1.msra.mxu0 0.0
    %769 = vmatprep.subr.mxu0 0.0
    %770 = vmatpush1.msra.mxu0 0.0
    %771 = vmatprep.subr.mxu0 0.0
    %772 = vmatpush1.msra.mxu0 0.0
    %773 = vmatprep.subr.mxu0 0.0
    %774 = vmatpush1.msra.mxu0 0.0
    %775 = vmatprep.subr.mxu0 0.0
    %776 = vmatpush1.msra.mxu0 0.0
    %777 = vmatprep.subr.mxu0 0.0
    %778 = vmatpush1.msra.mxu0 0.0
    %779 = vmatprep.subr.mxu0 0.0
    %780 = vmatpush1.msra.mxu0 0.0
    %781 = vmatprep.mubr.f32.mxu0 0.0
    %782 = vmatmul.mubr.f32.gmra.mrb[0].mxu0 %v712
    %v783 = vpop.f32.mrb[0].mxu0
    %v784 = vadd.f32 %v710, %v783
    %v785 = vpop.f32.mrb[0].mxu0
    %786 = vmatprep.mubr.f32.mxu0 0.0
    %787 = vmatmul.mubr.f32.gmra.mrb[0].mxu0 %v715
    %v788 = vpop.f32.mrb[0].mxu0
    %v789 = vadd.f32 %v710, %v788
    %v790 = vpop.f32.mrb[0].mxu0
    %791 = vdwg.mxu0
    %v792 = vadd.f32 %v784, %v154
    %v793 = vadd.f32 %v789, %v155
    %v794 = vsel %vm116, %v792, 0.0
    %795 = vadd.xlane.f32.xlu0 %v794
    %v796 = vpop.xlane.xlu0 %795
    %v797 = vsel %vm116, %v793, 0.0
    %798 = vadd.xlane.f32.xlu0 %v797
    %v799 = vpop.xlane.xlu0 %798
    %v800 = vmul.f32 %v796, %v123
    %v801 = vmul.f32 %v799, %v123
    %v802 = vsub.f32 %v792, %v800
    %v803 = vsub.f32 %v793, %v801
    %v804 = vmul.f32 %v802, %v802
    %v805 = vmul.f32 %v803, %v803
    %v806 = vsel %vm116, %v804, 0.0
    %807 = vadd.xlane.f32.xlu0 %v806
    %v808 = vpop.xlane.xlu0 %807
    %v809 = vsel %vm116, %v805, 0.0
    %810 = vadd.xlane.f32.xlu0 %v809
    %v811 = vpop.xlane.xlu0 %810
    %v812 = vmul.f32 %v808, %v123
    %v813 = vmul.f32 %v811, %v123
    %v814 = vadd.f32 %v812, 1e-12
    %v815 = vadd.f32 %v813, 1e-12
    %v816 = vrsqrt.pop %v814
    %v817 = vrsqrt.pop %v815
    %v818 = vmul.f32 %v802, %v816
    %v819 = vmul.f32 %v803, %v817
    %v820 = vlaneseq
    %v821 = vshrl.u32 %v820, 7
    %v822 = vsub.s32 0, %v821
    %v823 = vrot.slane %v178, %v822
    %v824 = vmul.f32 %v818, %v823
    %v825 = vmul.f32 %v819, %v823
    %v826 = vlaneseq
    %v827 = vshrl.u32 %v826, 7
    %v828 = vsub.s32 0, %v827
    %v829 = vrot.slane %v179, %v828
    %v830 = vadd.f32 %v824, %v829
    %v831 = vadd.f32 %v825, %v829
    %v832 = vlaneseq
    %v833 = vshrl.u32 %v832, 7
    %v834 = vsub.s32 0, %v833
    %v835 = vrot.slane %v180, %v834
    %v837 = vsel %vm116, %v830, 0
    %v840 = vsel %vm116, %v831, 0
    %842 = vmatprep.subr.mxu0 0.0
    %843 = vmatpush1.msra.mxu0 %v164
    %844 = vmatprep.subr.mxu0 0.0
    %845 = vmatpush1.msra.mxu0 %v165
    %846 = vmatprep.subr.mxu0 0.0
    %847 = vmatpush1.msra.mxu0 %v166
    %848 = vmatprep.subr.mxu0 0.0
    %849 = vmatpush1.msra.mxu0 %v167
    %850 = vmatprep.subr.mxu0 0.0
    %851 = vmatpush1.msra.mxu0 0.0
    %852 = vmatprep.subr.mxu0 0.0
    %853 = vmatpush1.msra.mxu0 0.0
    %854 = vmatprep.subr.mxu0 0.0
    %855 = vmatpush1.msra.mxu0 0.0
    %856 = vmatprep.subr.mxu0 0.0
    %857 = vmatpush1.msra.mxu0 0.0
    %858 = vmatprep.subr.mxu0 0.0
    %859 = vmatpush1.msra.mxu0 0.0
    %860 = vmatprep.subr.mxu0 0.0
    %861 = vmatpush1.msra.mxu0 0.0
    %862 = vmatprep.subr.mxu0 0.0
    %863 = vmatpush1.msra.mxu0 0.0
    %864 = vmatprep.subr.mxu0 0.0
    %865 = vmatpush1.msra.mxu0 0.0
    %866 = vmatprep.subr.mxu0 0.0
    %867 = vmatpush1.msra.mxu0 0.0
    %868 = vmatprep.subr.mxu0 0.0
    %869 = vmatpush1.msra.mxu0 0.0
    %870 = vmatprep.subr.mxu0 0.0
    %871 = vmatpush1.msra.mxu0 0.0
    %872 = vmatprep.subr.mxu0 0.0
    %873 = vmatpush1.msra.mxu0 0.0
    %874 = vmatprep.subr.mxu0 0.0
    %875 = vmatpush1.msra.mxu0 0.0
    %876 = vmatprep.subr.mxu0 0.0
    %877 = vmatpush1.msra.mxu0 0.0
    %878 = vmatprep.subr.mxu0 0.0
    %879 = vmatpush1.msra.mxu0 0.0
    %880 = vmatprep.subr.mxu0 0.0
    %881 = vmatpush1.msra.mxu0 0.0
    %882 = vmatprep.subr.mxu0 0.0
    %883 = vmatpush1.msra.mxu0 0.0
    %884 = vmatprep.subr.mxu0 0.0
    %885 = vmatpush1.msra.mxu0 0.0
    %886 = vmatprep.subr.mxu0 0.0
    %887 = vmatpush1.msra.mxu0 0.0
    %888 = vmatprep.subr.mxu0 0.0
    %889 = vmatpush1.msra.mxu0 0.0
    %890 = vmatprep.subr.mxu0 0.0
    %891 = vmatpush1.msra.mxu0 0.0
    %892 = vmatprep.subr.mxu0 0.0
    %893 = vmatpush1.msra.mxu0 0.0
    %894 = vmatprep.subr.mxu0 0.0
    %895 = vmatpush1.msra.mxu0 0.0
    %896 = vmatprep.subr.mxu0 0.0
    %897 = vmatpush1.msra.mxu0 0.0
    %898 = vmatprep.subr.mxu0 0.0
    %899 = vmatpush1.msra.mxu0 0.0
    %900 = vmatprep.subr.mxu0 0.0
    %901 = vmatpush1.msra.mxu0 0.0
    %902 = vmatprep.subr.mxu0 0.0
    %903 = vmatpush1.msra.mxu0 0.0
    %904 = vmatprep.subr.mxu0 0.0
    %905 = vmatpush1.msra.mxu0 0.0
    %906 = vmatprep.mubr.f32.mxu0 0.0
    %907 = vmatmul.mubr.f32.gmra.mrb[0].mxu0 %v837
    %v908 = vpop.f32.mrb[0].mxu0
    %v909 = vadd.f32 %v835, %v908
    %v910 = vpop.f32.mrb[0].mxu0
    %911 = vmatprep.mubr.f32.mxu0 0.0
    %912 = vmatmul.mubr.f32.gmra.mrb[0].mxu0 %v840
    %v913 = vpop.f32.mrb[0].mxu0
    %v914 = vadd.f32 %v835, %v913
    %v915 = vpop.f32.mrb[0].mxu0
    %916 = vdwg.mxu0
    %v917 = vmul.f32 %v909, 0.5
    %v918 = vmul.f32 %v914, 0.5
    %v919 = vmul.f32 %v909, 0.70710677
    %v920 = vmul.f32 %v914, 0.70710677
    %v921 = verf.f32.pop %v919
    %v922 = verf.f32.pop %v920
    %v923 = vadd.f32 %v921, 1.0
    %v924 = vadd.f32 %v922, 1.0
    %v925 = vmul.f32 %v917, %v923
    %v926 = vmul.f32 %v918, %v924
    %v927 = vlaneseq
    %v928 = vshrl.u32 %v927, 7
    %v929 = vsub.s32 0, %v928
    %v930 = vrot.slane %v181, %v929
    %v932 = vsel %vm472, %v925, 0
    %v935 = vsel %vm472, %v926, 0
    %937 = vmatprep.subr.mxu0 0.0
    %938 = vmatpush1.msra.mxu0 %v168
    %939 = vmatprep.subr.mxu0 0.0
    %940 = vmatpush1.msra.mxu0 %v169
    %941 = vmatprep.subr.mxu0 0.0
    %942 = vmatpush1.msra.mxu0 %v170
    %943 = vmatprep.subr.mxu0 0.0
    %944 = vmatpush1.msra.mxu0 %v171
    %945 = vmatprep.subr.mxu0 0.0
    %946 = vmatpush1.msra.mxu0 %v172
    %947 = vmatprep.subr.mxu0 0.0
    %948 = vmatpush1.msra.mxu0 %v173
    %949 = vmatprep.subr.mxu0 0.0
    %950 = vmatpush1.msra.mxu0 %v174
    %951 = vmatprep.subr.mxu0 0.0
    %952 = vmatpush1.msra.mxu0 %v175
    %953 = vmatprep.subr.mxu0 0.0
    %954 = vmatpush1.msra.mxu0 0.0
    %955 = vmatprep.subr.mxu0 0.0
    %956 = vmatpush1.msra.mxu0 0.0
    %957 = vmatprep.subr.mxu0 0.0
    %958 = vmatpush1.msra.mxu0 0.0
    %959 = vmatprep.subr.mxu0 0.0
    %960 = vmatpush1.msra.mxu0 0.0
    %961 = vmatprep.subr.mxu0 0.0
    %962 = vmatpush1.msra.mxu0 0.0
    %963 = vmatprep.subr.mxu0 0.0
    %964 = vmatpush1.msra.mxu0 0.0
    %965 = vmatprep.subr.mxu0 0.0
    %966 = vmatpush1.msra.mxu0 0.0
    %967 = vmatprep.subr.mxu0 0.0
    %968 = vmatpush1.msra.mxu0 0.0
    %969 = vmatprep.subr.mxu0 0.0
    %970 = vmatpush1.msra.mxu0 0.0
    %971 = vmatprep.subr.mxu0 0.0
    %972 = vmatpush1.msra.mxu0 0.0
    %973 = vmatprep.subr.mxu0 0.0
    %974 = vmatpush1.msra.mxu0 0.0
    %975 = vmatprep.subr.mxu0 0.0
    %976 = vmatpush1.msra.mxu0 0.0
    %977 = vmatprep.subr.mxu0 0.0
    %978 = vmatpush1.msra.mxu0 0.0
    %979 = vmatprep.subr.mxu0 0.0
    %980 = vmatpush1.msra.mxu0 0.0
    %981 = vmatprep.subr.mxu0 0.0
    %982 = vmatpush1.msra.mxu0 0.0
    %983 = vmatprep.subr.mxu0 0.0
    %984 = vmatpush1.msra.mxu0 0.0
    %985 = vmatprep.subr.mxu0 0.0
    %986 = vmatpush1.msra.mxu0 0.0
    %987 = vmatprep.subr.mxu0 0.0
    %988 = vmatpush1.msra.mxu0 0.0
    %989 = vmatprep.subr.mxu0 0.0
    %990 = vmatpush1.msra.mxu0 0.0
    %991 = vmatprep.subr.mxu0 0.0
    %992 = vmatpush1.msra.mxu0 0.0
    %993 = vmatprep.subr.mxu0 0.0
    %994 = vmatpush1.msra.mxu0 0.0
    %995 = vmatprep.subr.mxu0 0.0
    %996 = vmatpush1.msra.mxu0 0.0
    %997 = vmatprep.subr.mxu0 0.0
    %998 = vmatpush1.msra.mxu0 0.0
    %999 = vmatprep.subr.mxu0 0.0
    %1000 = vmatpush1.msra.mxu0 0.0
    %1001 = vmatprep.mubr.f32.mxu0 0.0
    %1002 = vmatmul.mubr.f32.gmra.mrb[0].mxu0 %v932
    %v1003 = vpop.f32.mrb[0].mxu0
    %v1004 = vadd.f32 %v930, %v1003
    %v1005 = vpop.f32.mrb[0].mxu0
    %1006 = vmatprep.mubr.f32.mxu0 0.0
    %1007 = vmatmul.mubr.f32.gmra.mrb[0].mxu0 %v935
    %v1008 = vpop.f32.mrb[0].mxu0
    %v1009 = vadd.f32 %v930, %v1008
    %v1010 = vpop.f32.mrb[0].mxu0
    %1011 = vdwg.mxu0
    %v1012 = vadd.f32 %v1004, %v830
    %v1013 = vadd.f32 %v1009, %v831
    %v1014 = vsel %vm116, %v1012, 0.0
    %1015 = vadd.xlane.f32.xlu0 %v1014
    %v1016 = vpop.xlane.xlu0 %1015
    %v1017 = vsel %vm116, %v1013, 0.0
    %1018 = vadd.xlane.f32.xlu0 %v1017
    %v1019 = vpop.xlane.xlu0 %1018
    %v1020 = vmul.f32 %v1016, %v123
    %v1021 = vmul.f32 %v1019, %v123
    %v1022 = vsub.f32 %v1012, %v1020
    %v1023 = vsub.f32 %v1013, %v1021
    %v1024 = vmul.f32 %v1022, %v1022
    %v1025 = vmul.f32 %v1023, %v1023
    %v1026 = vsel %vm116, %v1024, 0.0
    %1027 = vadd.xlane.f32.xlu0 %v1026
    %v1028 = vpop.xlane.xlu0 %1027
    %v1029 = vsel %vm116, %v1025, 0.0
    %1030 = vadd.xlane.f32.xlu0 %v1029
    %v1031 = vpop.xlane.xlu0 %1030
    %v1032 = vmul.f32 %v1028, %v123
    %v1033 = vmul.f32 %v1031, %v123
    %v1034 = vadd.f32 %v1032, 1e-12
    %v1035 = vadd.f32 %v1033, 1e-12
    %v1036 = vrsqrt.pop %v1034
    %v1037 = vrsqrt.pop %v1035
    %v1038 = vmul.f32 %v1022, %v1036
    %v1039 = vmul.f32 %v1023, %v1037
    %v1040 = vlaneseq
    %v1041 = vshrl.u32 %v1040, 7
    %v1042 = vsub.s32 0, %v1041
    %v1043 = vrot.slane %v182, %v1042
    %v1044 = vmul.f32 %v1038, %v1043
    %v1045 = vmul.f32 %v1039, %v1043
    %v1046 = vlaneseq
    %v1047 = vshrl.u32 %v1046, 7
    %v1048 = vsub.s32 0, %v1047
    %v1049 = vrot.slane %v183, %v1048
    %v1050 = vadd.f32 %v1044, %v1049
    %v1051 = vadd.f32 %v1045, %v1049
    %v1052 = vld [vmem:[%s2 + $0xe8] sm:$0xff]
    %v1053 = vld [vmem:[%s2 + $0xf0] sm:$0xff]
    %v1054 = vld [vmem:[%s2 + $0xf8] sm:$0xff]
    %v1055 = vld [vmem:[%s2 + $0x100] sm:$0xff]
    %v1056 = vld [vmem:[%s2 + $0x108] sm:$0xff]
    %v1057 = vld [vmem:[%s2 + $0x110] sm:$0xff]
    %v1058 = vld [vmem:[%s2 + $0x118] sm:$0xff]
    %v1059 = vld [vmem:[%s2 + $0x120] sm:$0xff]
    %v1060 = vld [vmem:[%s2 + $0x128] sm:$0xff]
    %v1061 = vld [vmem:[%s2 + $0x130] sm:$0xff]
    %v1062 = vld [vmem:[%s2 + $0x138] sm:$0xff]
    %v1063 = vld [vmem:[%s2 + $0x140] sm:$0xff]
    %v1064 = vld [vmem:[%s2 + $0x148] sm:$0xff]
    %v1065 = vld [vmem:[%s2 + $0x150] sm:$0xff]
    %v1066 = vld [vmem:[%s2 + $0x158] sm:$0xff]
    %v1067 = vld [vmem:[%s2 + $0x160] sm:$0xff]
    %v1068 = vld [vmem:[%s2 + $0x168] sm:$0xff]
    %v1069 = vld [vmem:[%s2 + $0x170] sm:$0xff]
    %v1070 = vld [vmem:[%s2 + $0x178] sm:$0xff]
    %v1071 = vld [vmem:[%s2 + $0x180] sm:$0xff]
    %v1072 = vld [vmem:[%s2 + $0x188] sm:$0x1]
    %v1073 = vld [vmem:[%s2 + $0x189] sm:$0x1]
    %v1074 = vld [vmem:[%s2 + $0x18a] sm:$0x1]
    %v1075 = vld [vmem:[%s2 + $0x18b] sm:$0x1]
    %v1076 = vld [vmem:[%s2 + $0x18c] sm:$0x1]
    %v1077 = vld [vmem:[%s2 + $0x18d] sm:$0x1]
    %v1078 = vld [vmem:[%s2 + $0x18e] sm:$0x1]
    %v1079 = vld [vmem:[%s2 + $0x18f] sm:$0x1]
    %v1080 = vlaneseq
    %v1081 = vshrl.u32 %v1080, 7
    %v1082 = vsub.s32 0, %v1081
    %v1083 = vrot.slane %v1072, %v1082
    %v1085 = vsel %vm116, %v1050, 0
    %v1088 = vsel %vm116, %v1051, 0
    %1090 = vmatprep.subr.mxu0 0.0
    %1091 = vmatpush1.msra.mxu0 %v1052
    %1092 = vmatprep.subr.mxu0 0.0
    %1093 = vmatpush1.msra.mxu0 %v1053
    %1094 = vmatprep.subr.mxu0 0.0
    %1095 = vmatpush1.msra.mxu0 %v1054
    %1096 = vmatprep.subr.mxu0 0.0
    %1097 = vmatpush1.msra.mxu0 %v1055
    %1098 = vmatprep.subr.mxu0 0.0
    %1099 = vmatpush1.msra.mxu0 0.0
    %1100 = vmatprep.subr.mxu0 0.0
    %1101 = vmatpush1.msra.mxu0 0.0
    %1102 = vmatprep.subr.mxu0 0.0
    %1103 = vmatpush1.msra.mxu0 0.0
    %1104 = vmatprep.subr.mxu0 0.0
    %1105 = vmatpush1.msra.mxu0 0.0
    %1106 = vmatprep.subr.mxu0 0.0
    %1107 = vmatpush1.msra.mxu0 0.0
    %1108 = vmatprep.subr.mxu0 0.0
    %1109 = vmatpush1.msra.mxu0 0.0
    %1110 = vmatprep.subr.mxu0 0.0
    %1111 = vmatpush1.msra.mxu0 0.0
    %1112 = vmatprep.subr.mxu0 0.0
    %1113 = vmatpush1.msra.mxu0 0.0
    %1114 = vmatprep.subr.mxu0 0.0
    %1115 = vmatpush1.msra.mxu0 0.0
    %1116 = vmatprep.subr.mxu0 0.0
    %1117 = vmatpush1.msra.mxu0 0.0
    %1118 = vmatprep.subr.mxu0 0.0
    %1119 = vmatpush1.msra.mxu0 0.0
    %1120 = vmatprep.subr.mxu0 0.0
    %1121 = vmatpush1.msra.mxu0 0.0
    %1122 = vmatprep.subr.mxu0 0.0
    %1123 = vmatpush1.msra.mxu0 0.0
    %1124 = vmatprep.subr.mxu0 0.0
    %1125 = vmatpush1.msra.mxu0 0.0
    %1126 = vmatprep.subr.mxu0 0.0
    %1127 = vmatpush1.msra.mxu0 0.0
    %1128 = vmatprep.subr.mxu0 0.0
    %1129 = vmatpush1.msra.mxu0 0.0
    %1130 = vmatprep.subr.mxu0 0.0
    %1131 = vmatpush1.msra.mxu0 0.0
    %1132 = vmatprep.subr.mxu0 0.0
    %1133 = vmatpush1.msra.mxu0 0.0
    %1134 = vmatprep.subr.mxu0 0.0
    %1135 = vmatpush1.msra.mxu0 0.0
    %1136 = vmatprep.subr.mxu0 0.0
    %1137 = vmatpush1.msra.mxu0 0.0
    %1138 = vmatprep.subr.mxu0 0.0
    %1139 = vmatpush1.msra.mxu0 0.0
    %1140 = vmatprep.subr.mxu0 0.0
    %1141 = vmatpush1.msra.mxu0 0.0
    %1142 = vmatprep.subr.mxu0 0.0
    %1143 = vmatpush1.msra.mxu0 0.0
    %1144 = vmatprep.subr.mxu0 0.0
    %1145 = vmatpush1.msra.mxu0 0.0
    %1146 = vmatprep.subr.mxu0 0.0
    %1147 = vmatpush1.msra.mxu0 0.0
    %1148 = vmatprep.subr.mxu0 0.0
    %1149 = vmatpush1.msra.mxu0 0.0
    %1150 = vmatprep.subr.mxu0 0.0
    %1151 = vmatpush1.msra.mxu0 0.0
    %1152 = vmatprep.subr.mxu0 0.0
    %1153 = vmatpush1.msra.mxu0 0.0
    %1154 = vmatprep.mubr.f32.mxu0 0.0
    %1155 = vmatmul.mubr.f32.gmra.mrb[0].mxu0 %v1085
    %v1156 = vpop.f32.mrb[0].mxu0
    %v1157 = vadd.f32 %v1083, %v1156
    %v1158 = vpop.f32.mrb[0].mxu0
    %1159 = vmatprep.mubr.f32.mxu0 0.0
    %1160 = vmatmul.mubr.f32.gmra.mrb[0].mxu0 %v1088
    %v1161 = vpop.f32.mrb[0].mxu0
    %v1162 = vadd.f32 %v1083, %v1161
    %v1163 = vpop.f32.mrb[0].mxu0
    %1164 = vdwg.mxu0
    %v1165 = vmul.f32 %v1157, %v278
    %v1166 = vmul.f32 %v1162, %v280
    %v1167 = vmul.f32 %v1157, %v282
    %v1168 = vmul.f32 %v1162, %v284
    %v1169 = vmul.f32 %v1157, %v286
    %v1170 = vmul.f32 %v1162, %v288
    %v1171 = vmul.f32 %v1157, %v290
    %v1172 = vmul.f32 %v1162, %v292
    %v1173 = vmul.f32 %v1157, %v310
    %v1174 = vmul.f32 %v1162, %v312
    %v1175 = vmul.f32 %v1157, %v314
    %v1176 = vmul.f32 %v1162, %v316
    %v1177 = vmul.f32 %v1157, %v318
    %v1178 = vmul.f32 %v1162, %v320
    %v1179 = vmul.f32 %v1157, %v322
    %v1180 = vmul.f32 %v1162, %v324
    %1189 = vrot.lane.b32.xlu0 %v1165, 96
    %v1190 = vpop.permute.xlu0 %1189
    %1191 = vrot.lane.b32.xlu0 %v1166, 96
    %v1192 = vpop.permute.xlu0 %1191
    %1193 = vrot.lane.b32.xlu0 %v1167, 96
    %v1194 = vpop.permute.xlu0 %1193
    %1195 = vrot.lane.b32.xlu0 %v1168, 96
    %v1196 = vpop.permute.xlu0 %1195
    %1197 = vrot.lane.b32.xlu0 %v1169, 96
    %v1198 = vpop.permute.xlu0 %1197
    %1199 = vrot.lane.b32.xlu0 %v1170, 96
    %v1200 = vpop.permute.xlu0 %1199
    %1201 = vrot.lane.b32.xlu0 %v1171, 96
    %v1202 = vpop.permute.xlu0 %1201
    %1203 = vrot.lane.b32.xlu0 %v1172, 96
    %v1204 = vpop.permute.xlu0 %1203
    %v1206 = vsel %vm116, %v1157, 0
    %v1209 = vsel %vm116, %v1162, 0
    %v1211 = vsel %vm116, %v1190, 0
    %v1213 = vsel %vm116, %v1192, 0
    %v1215 = vsel %vm116, %v1194, 0
    %v1217 = vsel %vm116, %v1196, 0
    %v1219 = vsel %vm116, %v1198, 0
    %v1221 = vsel %vm116, %v1200, 0
    %v1223 = vsel %vm116, %v1202, 0
    %v1225 = vsel %vm116, %v1204, 0
    %1227 = vmatprep.subr.mxu0 0.0
    %1228 = vmatpush1.xpose.msra.mxu0 %v1211
    %1229 = vmatprep.subr.mxu0 0.0
    %1230 = vmatpush1.xpose.msra.mxu0 %v1213
    %1231 = vmatprep.subr.mxu0 0.0
    %1232 = vmatpush1.xpose.msra.mxu0 %v1215
    %1233 = vmatprep.subr.mxu0 0.0
    %1234 = vmatpush1.xpose.msra.mxu0 %v1217
    %1235 = vmatprep.subr.mxu0 0.0
    %1236 = vmatpush1.xpose.msra.mxu0 %v1219
    %1237 = vmatprep.subr.mxu0 0.0
    %1238 = vmatpush1.xpose.msra.mxu0 %v1221
    %1239 = vmatprep.subr.mxu0 0.0
    %1240 = vmatpush1.xpose.msra.mxu0 %v1223
    %1241 = vmatprep.subr.mxu0 0.0
    %1242 = vmatpush1.xpose.msra.mxu0 %v1225
    %1243 = vmatprep.subr.mxu0 0.0
    %1244 = vmatpush1.xpose.msra.mxu0 0.0
    %1245 = vmatprep.subr.mxu0 0.0
    %1246 = vmatpush1.xpose.msra.mxu0 0.0
    %1247 = vmatprep.subr.mxu0 0.0
    %1248 = vmatpush1.xpose.msra.mxu0 0.0
    %1249 = vmatprep.subr.mxu0 0.0
    %1250 = vmatpush1.xpose.msra.mxu0 0.0
    %1251 = vmatprep.subr.mxu0 0.0
    %1252 = vmatpush1.xpose.msra.mxu0 0.0
    %1253 = vmatprep.subr.mxu0 0.0
    %1254 = vmatpush1.xpose.msra.mxu0 0.0
    %1255 = vmatprep.subr.mxu0 0.0
    %1256 = vmatpush1.xpose.msra.mxu0 0.0
    %1257 = vmatprep.subr.mxu0 0.0
    %1258 = vmatpush1.xpose.msra.mxu0 0.0
    %1259 = vmatprep.subr.mxu0 0.0
    %1260 = vmatpush1.xpose.msra.mxu0 0.0
    %1261 = vmatprep.subr.mxu0 0.0
    %1262 = vmatpush1.xpose.msra.mxu0 0.0
    %1263 = vmatprep.subr.mxu0 0.0
    %1264 = vmatpush1.xpose.msra.mxu0 0.0
    %1265 = vmatprep.subr.mxu0 0.0
    %1266 = vmatpush1.xpose.msra.mxu0 0.0
    %1267 = vmatprep.subr.mxu0 0.0
    %1268 = vmatpush1.xpose.msra.mxu0 0.0
    %1269 = vmatprep.subr.mxu0 0.0
    %1270 = vmatpush1.xpose.msra.mxu0 0.0
    %1271 = vmatprep.subr.mxu0 0.0
    %1272 = vmatpush1.xpose.msra.mxu0 0.0
    %1273 = vmatprep.subr.mxu0 0.0
    %1274 = vmatpush1.xpose.msra.mxu0 0.0
    %1275 = vmatprep.subr.mxu0 0.0
    %1276 = vmatpush1.xpose.msra.mxu0 0.0
    %1277 = vmatprep.subr.mxu0 0.0
    %1278 = vmatpush1.xpose.msra.mxu0 0.0
    %1279 = vmatprep.subr.mxu0 0.0
    %1280 = vmatpush1.xpose.msra.mxu0 0.0
    %1281 = vmatprep.subr.mxu0 0.0
    %1282 = vmatpush1.xpose.msra.mxu0 0.0
    %1283 = vmatprep.subr.mxu0 0.0
    %1284 = vmatpush1.xpose.msra.mxu0 0.0
    %1285 = vmatprep.subr.mxu0 0.0
    %1286 = vmatpush1.xpose.msra.mxu0 0.0
    %1287 = vmatprep.subr.mxu0 0.0
    %1288 = vmatpush1.xpose.msra.mxu0 0.0
    %1289 = vmatprep.subr.mxu0 0.0
    %1290 = vmatpush1.xpose.msra.mxu0 0.0
    %1291 = vmatprep.mubr.f32.mxu0 0.0
    %1292 = vmatmul.mubr.f32.gmra.mrb[0].mxu0 %v1206
    %v1293 = vpop.f32.mrb[0].mxu0
    %v1294 = vadd.f32 0.0, %v1293
    %v1295 = vpop.f32.mrb[0].mxu0
    %1296 = vmatprep.mubr.f32.mxu0 0.0
    %1297 = vmatmul.mubr.f32.gmra.mrb[0].mxu0 %v1209
    %v1298 = vpop.f32.mrb[0].mxu0
    %v1299 = vadd.f32 0.0, %v1298
    %v1300 = vpop.f32.mrb[0].mxu0
    %1301 = vdwg.mxu0
    %v1302 = vmul.f32 %v1294, 0.35355338
    %v1303 = vmul.f32 %v1299, 0.35355338
    %v1304 = vadd.f32 %v1302, %v465
    %v1305 = vadd.f32 %v1303, %v467
    %v1306 = vsel %vm472, %v1304, -inf
    %1307 = vmax.xlane.f32.xlu0 %v1306
    %v1308 = vpop.xlane.xlu0 %1307
    %v1309 = vsel %vm472, %v1305, -inf
    %1310 = vmax.xlane.f32.xlu0 %v1309
    %v1311 = vpop.xlane.xlu0 %1310
    %v1312 = vsub.f32 %v1304, %v1308
    %v1313 = vsub.f32 %v1305, %v1311
    %v1314 = vmul.f32 %v1312, 1.442695
    %v1315 = vpow.pop %v1314
    %v1316 = vmul.f32 %v1313, 1.442695
    %v1317 = vpow.pop %v1316
    %v1319 = vsel %vm472, %v1315, 0
    %v1322 = vsel %vm472, %v1317, 0
    %1324 = vmatprep.subr.mxu0 0.0
    %1325 = vmatpush1.msra.mxu0 %v486
    %1326 = vmatprep.subr.mxu0 0.0
    %1327 = vmatpush1.msra.mxu0 %v488
    %1328 = vmatprep.subr.mxu0 0.0
    %1329 = vmatpush1.msra.mxu0 %v490
    %1330 = vmatprep.subr.mxu0 0.0
    %1331 = vmatpush1.msra.mxu0 %v492
    %1332 = vmatprep.subr.mxu0 0.0
    %1333 = vmatpush1.msra.mxu0 %v494
    %1334 = vmatprep.subr.mxu0 0.0
    %1335 = vmatpush1.msra.mxu0 %v496
    %1336 = vmatprep.subr.mxu0 0.0
    %1337 = vmatpush1.msra.mxu0 %v498
    %1338 = vmatprep.subr.mxu0 0.0
    %1339 = vmatpush1.msra.mxu0 %v500
    %1340 = vmatprep.subr.mxu0 0.0
    %1341 = vmatpush1.msra.mxu0 0.0
    %1342 = vmatprep.subr.mxu0 0.0
    %1343 = vmatpush1.msra.mxu0 0.0
    %1344 = vmatprep.subr.mxu0 0.0
    %1345 = vmatpush1.msra.mxu0 0.0
    %1346 = vmatprep.subr.mxu0 0.0
    %1347 = vmatpush1.msra.mxu0 0.0
    %1348 = vmatprep.subr.mxu0 0.0
    %1349 = vmatpush1.msra.mxu0 0.0
    %1350 = vmatprep.subr.mxu0 0.0
    %1351 = vmatpush1.msra.mxu0 0.0
    %1352 = vmatprep.subr.mxu0 0.0
    %1353 = vmatpush1.msra.mxu0 0.0
    %1354 = vmatprep.subr.mxu0 0.0
    %1355 = vmatpush1.msra.mxu0 0.0
    %1356 = vmatprep.subr.mxu0 0.0
    %1357 = vmatpush1.msra.mxu0 0.0
    %1358 = vmatprep.subr.mxu0 0.0
    %1359 = vmatpush1.msra.mxu0 0.0
    %1360 = vmatprep.subr.mxu0 0.0
    %1361 = vmatpush1.msra.mxu0 0.0
    %1362 = vmatprep.subr.mxu0 0.0
    %1363 = vmatpush1.msra.mxu0 0.0
    %1364 = vmatprep.subr.mxu0 0.0
    %1365 = vmatpush1.msra.mxu0 0.0
    %1366 = vmatprep.subr.mxu0 0.0
    %1367 = vmatpush1.msra.mxu0 0.0
    %1368 = vmatprep.subr.mxu0 0.0
    %1369 = vmatpush1.msra.mxu0 0.0
    %1370 = vmatprep.subr.mxu0 0.0
    %1371 = vmatpush1.msra.mxu0 0.0
    %1372 = vmatprep.subr.mxu0 0.0
    %1373 = vmatpush1.msra.mxu0 0.0
    %1374 = vmatprep.subr.mxu0 0.0
    %1375 = vmatpush1.msra.mxu0 0.0
    %1376 = vmatprep.subr.mxu0 0.0
    %1377 = vmatpush1.msra.mxu0 0.0
    %1378 = vmatprep.subr.mxu0 0.0
    %1379 = vmatpush1.msra.mxu0 0.0
    %1380 = vmatprep.subr.mxu0 0.0
    %1381 = vmatpush1.msra.mxu0 0.0
    %1382 = vmatprep.subr.mxu0 0.0
    %1383 = vmatpush1.msra.mxu0 0.0
    %1384 = vmatprep.subr.mxu0 0.0
    %1385 = vmatpush1.msra.mxu0 0.0
    %1386 = vmatprep.subr.mxu0 0.0
    %1387 = vmatpush1.msra.mxu0 0.0
    %1388 = vmatprep.mubr.f32.mxu0 0.0
    %1389 = vmatmul.mubr.f32.gmra.mrb[0].mxu0 %v1319
    %v1390 = vpop.f32.mrb[0].mxu0
    %v1391 = vadd.f32 0.0, %v1390
    %v1392 = vpop.f32.mrb[0].mxu0
    %1393 = vmatprep.mubr.f32.mxu0 0.0
    %1394 = vmatmul.mubr.f32.gmra.mrb[0].mxu0 %v1322
    %v1395 = vpop.f32.mrb[0].mxu0
    %v1396 = vadd.f32 0.0, %v1395
    %v1397 = vpop.f32.mrb[0].mxu0
    %1398 = vdwg.mxu0
    %v1399 = vrcp.pop %v1391
    %v1400 = vmul.f32 %v1315, %v1399
    %v1401 = vrcp.pop %v1396
    %v1402 = vmul.f32 %v1317, %v1401
    %1411 = vrot.lane.b32.xlu0 %v1173, 64
    %v1412 = vpop.permute.xlu0 %1411
    %1413 = vrot.lane.b32.xlu0 %v1174, 64
    %v1414 = vpop.permute.xlu0 %1413
    %1415 = vrot.lane.b32.xlu0 %v1175, 64
    %v1416 = vpop.permute.xlu0 %1415
    %1417 = vrot.lane.b32.xlu0 %v1176, 64
    %v1418 = vpop.permute.xlu0 %1417
    %1419 = vrot.lane.b32.xlu0 %v1177, 64
    %v1420 = vpop.permute.xlu0 %1419
    %1421 = vrot.lane.b32.xlu0 %v1178, 64
    %v1422 = vpop.permute.xlu0 %1421
    %1423 = vrot.lane.b32.xlu0 %v1179, 64
    %v1424 = vpop.permute.xlu0 %1423
    %1425 = vrot.lane.b32.xlu0 %v1180, 64
    %v1426 = vpop.permute.xlu0 %1425
    %v1436 = vsel %vm472, %v1400, 0
    %v1439 = vsel %vm472, %v1402, 0
    %1441 = vmatprep.subr.mxu0 0.0
    %1442 = vmatpush1.msra.mxu0 %v1412
    %1443 = vmatprep.subr.mxu0 0.0
    %1444 = vmatpush1.msra.mxu0 %v1414
    %1445 = vmatprep.subr.mxu0 0.0
    %1446 = vmatpush1.msra.mxu0 %v1416
    %1447 = vmatprep.subr.mxu0 0.0
    %1448 = vmatpush1.msra.mxu0 %v1418
    %1449 = vmatprep.subr.mxu0 0.0
    %1450 = vmatpush1.msra.mxu0 %v1420
    %1451 = vmatprep.subr.mxu0 0.0
    %1452 = vmatpush1.msra.mxu0 %v1422
    %1453 = vmatprep.subr.mxu0 0.0
    %1454 = vmatpush1.msra.mxu0 %v1424
    %1455 = vmatprep.subr.mxu0 0.0
    %1456 = vmatpush1.msra.mxu0 %v1426
    %1457 = vmatprep.subr.mxu0 0.0
    %1458 = vmatpush1.msra.mxu0 0.0
    %1459 = vmatprep.subr.mxu0 0.0
    %1460 = vmatpush1.msra.mxu0 0.0
    %1461 = vmatprep.subr.mxu0 0.0
    %1462 = vmatpush1.msra.mxu0 0.0
    %1463 = vmatprep.subr.mxu0 0.0
    %1464 = vmatpush1.msra.mxu0 0.0
    %1465 = vmatprep.subr.mxu0 0.0
    %1466 = vmatpush1.msra.mxu0 0.0
    %1467 = vmatprep.subr.mxu0 0.0
    %1468 = vmatpush1.msra.mxu0 0.0
    %1469 = vmatprep.subr.mxu0 0.0
    %1470 = vmatpush1.msra.mxu0 0.0
    %1471 = vmatprep.subr.mxu0 0.0
    %1472 = vmatpush1.msra.mxu0 0.0
    %1473 = vmatprep.subr.mxu0 0.0
    %1474 = vmatpush1.msra.mxu0 0.0
    %1475 = vmatprep.subr.mxu0 0.0
    %1476 = vmatpush1.msra.mxu0 0.0
    %1477 = vmatprep.subr.mxu0 0.0
    %1478 = vmatpush1.msra.mxu0 0.0
    %1479 = vmatprep.subr.mxu0 0.0
    %1480 = vmatpush1.msra.mxu0 0.0
    %1481 = vmatprep.subr.mxu0 0.0
    %1482 = vmatpush1.msra.mxu0 0.0
    %1483 = vmatprep.subr.mxu0 0.0
    %1484 = vmatpush1.msra.mxu0 0.0
    %1485 = vmatprep.subr.mxu0 0.0
    %1486 = vmatpush1.msra.mxu0 0.0
    %1487 = vmatprep.subr.mxu0 0.0
    %1488 = vmatpush1.msra.mxu0 0.0
    %1489 = vmatprep.subr.mxu0 0.0
    %1490 = vmatpush1.msra.mxu0 0.0
    %1491 = vmatprep.subr.mxu0 0.0
    %1492 = vmatpush1.msra.mxu0 0.0
    %1493 = vmatprep.subr.mxu0 0.0
    %1494 = vmatpush1.msra.mxu0 0.0
    %1495 = vmatprep.subr.mxu0 0.0
    %1496 = vmatpush1.msra.mxu0 0.0
    %1497 = vmatprep.subr.mxu0 0.0
    %1498 = vmatpush1.msra.mxu0 0.0
    %1499 = vmatprep.subr.mxu0 0.0
    %1500 = vmatpush1.msra.mxu0 0.0
    %1501 = vmatprep.subr.mxu0 0.0
    %1502 = vmatpush1.msra.mxu0 0.0
    %1503 = vmatprep.subr.mxu0 0.0
    %1504 = vmatpush1.msra.mxu0 0.0
    %1505 = vmatprep.mubr.f32.mxu0 0.0
    %1506 = vmatmul.mubr.f32.gmra.mrb[0].mxu0 %v1436
    %v1507 = vpop.f32.mrb[0].mxu0
    %v1508 = vadd.f32 0.0, %v1507
    %v1509 = vpop.f32.mrb[0].mxu0
    %1510 = vmatprep.mubr.f32.mxu0 0.0
    %1511 = vmatmul.mubr.f32.gmra.mrb[0].mxu0 %v1439
    %v1512 = vpop.f32.mrb[0].mxu0
    %v1513 = vadd.f32 0.0, %v1512
    %v1514 = vpop.f32.mrb[0].mxu0
    %1515 = vdwg.mxu0
    %v1516 = vlaneseq
    %v1517 = vshrl.u32 %v1516, 7
    %v1518 = vsub.s32 0, %v1517
    %v1519 = vrot.slane %v1073, %v1518
    %v1521 = vsel %vm116, %v1508, 0
    %v1524 = vsel %vm116, %v1513, 0
    %1526 = vmatprep.subr.mxu0 0.0
    %1527 = vmatpush1.msra.mxu0 %v1056
    %1528 = vmatprep.subr.mxu0 0.0
    %1529 = vmatpush1.msra.mxu0 %v1057
    %1530 = vmatprep.subr.mxu0 0.0
    %1531 = vmatpush1.msra.mxu0 %v1058
    %1532 = vmatprep.subr.mxu0 0.0
    %1533 = vmatpush1.msra.mxu0 %v1059
    %1534 = vmatprep.subr.mxu0 0.0
    %1535 = vmatpush1.msra.mxu0 0.0
    %1536 = vmatprep.subr.mxu0 0.0
    %1537 = vmatpush1.msra.mxu0 0.0
    %1538 = vmatprep.subr.mxu0 0.0
    %1539 = vmatpush1.msra.mxu0 0.0
    %1540 = vmatprep.subr.mxu0 0.0
    %1541 = vmatpush1.msra.mxu0 0.0
    %1542 = vmatprep.subr.mxu0 0.0
    %1543 = vmatpush1.msra.mxu0 0.0
    %1544 = vmatprep.subr.mxu0 0.0
    %1545 = vmatpush1.msra.mxu0 0.0
    %1546 = vmatprep.subr.mxu0 0.0
    %1547 = vmatpush1.msra.mxu0 0.0
    %1548 = vmatprep.subr.mxu0 0.0
    %1549 = vmatpush1.msra.mxu0 0.0
    %1550 = vmatprep.subr.mxu0 0.0
    %1551 = vmatpush1.msra.mxu0 0.0
    %1552 = vmatprep.subr.mxu0 0.0
    %1553 = vmatpush1.msra.mxu0 0.0
    %1554 = vmatprep.subr.mxu0 0.0
    %1555 = vmatpush1.msra.mxu0 0.0
    %1556 = vmatprep.subr.mxu0 0.0
    %1557 = vmatpush1.msra.mxu0 0.0
    %1558 = vmatprep.subr.mxu0 0.0
    %1559 = vmatpush1.msra.mxu0 0.0
    %1560 = vmatprep.subr.mxu0 0.0
    %1561 = vmatpush1.msra.mxu0 0.0
    %1562 = vmatprep.subr.mxu0 0.0
    %1563 = vmatpush1.msra.mxu0 0.0
    %1564 = vmatprep.subr.mxu0 0.0
    %1565 = vmatpush1.msra.mxu0 0.0
    %1566 = vmatprep.subr.mxu0 0.0
    %1567 = vmatpush1.msra.mxu0 0.0
    %1568 = vmatprep.subr.mxu0 0.0
    %1569 = vmatpush1.msra.mxu0 0.0
    %1570 = vmatprep.subr.mxu0 0.0
    %1571 = vmatpush1.msra.mxu0 0.0
    %1572 = vmatprep.subr.mxu0 0.0
    %1573 = vmatpush1.msra.mxu0 0.0
    %1574 = vmatprep.subr.mxu0 0.0
    %1575 = vmatpush1.msra.mxu0 0.0
    %1576 = vmatprep.subr.mxu0 0.0
    %1577 = vmatpush1.msra.mxu0 0.0
    %1578 = vmatprep.subr.mxu0 0.0
    %1579 = vmatpush1.msra.mxu0 0.0
    %1580 = vmatprep.subr.mxu0 0.0
    %1581 = vmatpush1.msra.mxu0 0.0
    %1582 = vmatprep.subr.mxu0 0.0
    %1583 = vmatpush1.msra.mxu0 0.0
    %1584 = vmatprep.subr.mxu0 0.0
    %1585 = vmatpush1.msra.mxu0 0.0
    %1586 = vmatprep.subr.mxu0 0.0
    %1587 = vmatpush1.msra.mxu0 0.0
    %1588 = vmatprep.subr.mxu0 0.0
    %1589 = vmatpush1.msra.mxu0 0.0
    %1590 = vmatprep.mubr.f32.mxu0 0.0
    %1591 = vmatmul.mubr.f32.gmra.mrb[0].mxu0 %v1521
    %v1592 = vpop.f32.mrb[0].mxu0
    %v1593 = vadd.f32 %v1519, %v1592
    %v1594 = vpop.f32.mrb[0].mxu0
    %1595 = vmatprep.mubr.f32.mxu0 0.0
    %1596 = vmatmul.mubr.f32.gmra.mrb[0].mxu0 %v1524
    %v1597 = vpop.f32.mrb[0].mxu0
    %v1598 = vadd.f32 %v1519, %v1597
    %v1599 = vpop.f32.mrb[0].mxu0
    %1600 = vdwg.mxu0
    %v1601 = vadd.f32 %v1593, %v1050
    %v1602 = vadd.f32 %v1598, %v1051
    %v1603 = vsel %vm116, %v1601, 0.0
    %1604 = vadd.xlane.f32.xlu0 %v1603
    %v1605 = vpop.xlane.xlu0 %1604
    %v1606 = vsel %vm116, %v1602, 0.0
    %1607 = vadd.xlane.f32.xlu0 %v1606
    %v1608 = vpop.xlane.xlu0 %1607
    %v1609 = vmul.f32 %v1605, %v123
    %v1610 = vmul.f32 %v1608, %v123
    %v1611 = vsub.f32 %v1601, %v1609
    %v1612 = vsub.f32 %v1602, %v1610
    %v1613 = vmul.f32 %v1611, %v1611
    %v1614 = vmul.f32 %v1612, %v1612
    %v1615 = vsel %vm116, %v1613, 0.0
    %1616 = vadd.xlane.f32.xlu0 %v1615
    %v1617 = vpop.xlane.xlu0 %1616
    %v1618 = vsel %vm116, %v1614, 0.0
    %1619 = vadd.xlane.f32.xlu0 %v1618
    %v1620 = vpop.xlane.xlu0 %1619
    %v1621 = vmul.f32 %v1617, %v123
    %v1622 = vmul.f32 %v1620, %v123
    %v1623 = vadd.f32 %v1621, 1e-12
    %v1624 = vadd.f32 %v1622, 1e-12
    %v1625 = vrsqrt.pop %v1623
    %v1626 = vrsqrt.pop %v1624
    %v1627 = vmul.f32 %v1611, %v1625
    %v1628 = vmul.f32 %v1612, %v1626
    %v1629 = vlaneseq
    %v1630 = vshrl.u32 %v1629, 7
    %v1631 = vsub.s32 0, %v1630
    %v1632 = vrot.slane %v1074, %v1631
    %v1633 = vmul.f32 %v1627, %v1632
    %v1634 = vmul.f32 %v1628, %v1632
    %v1635 = vlaneseq
    %v1636 = vshrl.u32 %v1635, 7
    %v1637 = vsub.s32 0, %v1636
    %v1638 = vrot.slane %v1075, %v1637
    %v1639 = vadd.f32 %v1633, %v1638
    %v1640 = vadd.f32 %v1634, %v1638
    %v1641 = vlaneseq
    %v1642 = vshrl.u32 %v1641, 7
    %v1643 = vsub.s32 0, %v1642
    %v1644 = vrot.slane %v1076, %v1643
    %v1646 = vsel %vm116, %v1639, 0
    %v1649 = vsel %vm116, %v1640, 0
    %1651 = vmatprep.subr.mxu0 0.0
    %1652 = vmatpush1.msra.mxu0 %v1060
    %1653 = vmatprep.subr.mxu0 0.0
    %1654 = vmatpush1.msra.mxu0 %v1061
    %1655 = vmatprep.subr.mxu0 0.0
    %1656 = vmatpush1.msra.mxu0 %v1062
    %1657 = vmatprep.subr.mxu0 0.0
    %1658 = vmatpush1.msra.mxu0 %v1063
    %1659 = vmatprep.subr.mxu0 0.0
    %1660 = vmatpush1.msra.mxu0 0.0
    %1661 = vmatprep.subr.mxu0 0.0
    %1662 = vmatpush1.msra.mxu0 0.0
    %1663 = vmatprep.subr.mxu0 0.0
    %1664 = vmatpush1.msra.mxu0 0.0
    %1665 = vmatprep.subr.mxu0 0.0
    %1666 = vmatpush1.msra.mxu0 0.0
    %1667 = vmatprep.subr.mxu0 0.0
    %1668 = vmatpush1.msra.mxu0 0.0
    %1669 = vmatprep.subr.mxu0 0.0
    %1670 = vmatpush1.msra.mxu0 0.0
    %1671 = vmatprep.subr.mxu0 0.0
    %1672 = vmatpush1.msra.mxu0 0.0
    %1673 = vmatprep.subr.mxu0 0.0
    %1674 = vmatpush1.msra.mxu0 0.0
    %1675 = vmatprep.subr.mxu0 0.0
    %1676 = vmatpush1.msra.mxu0 0.0
    %1677 = vmatprep.subr.mxu0 0.0
    %1678 = vmatpush1.msra.mxu0 0.0
    %1679 = vmatprep.subr.mxu0 0.0
    %1680 = vmatpush1.msra.mxu0 0.0
    %1681 = vmatprep.subr.mxu0 0.0
    %1682 = vmatpush1.msra.mxu0 0.0
    %1683 = vmatprep.subr.mxu0 0.0
    %1684 = vmatpush1.msra.mxu0 0.0
    %1685 = vmatprep.subr.mxu0 0.0
    %1686 = vmatpush1.msra.mxu0 0.0
    %1687 = vmatprep.subr.mxu0 0.0
    %1688 = vmatpush1.msra.mxu0 0.0
    %1689 = vmatprep.subr.mxu0 0.0
    %1690 = vmatpush1.msra.mxu0 0.0
    %1691 = vmatprep.subr.mxu0 0.0
    %1692 = vmatpush1.msra.mxu0 0.0
    %1693 = vmatprep.subr.mxu0 0.0
    %1694 = vmatpush1.msra.mxu0 0.0
    %1695 = vmatprep.subr.mxu0 0.0
    %1696 = vmatpush1.msra.mxu0 0.0
    %1697 = vmatprep.subr.mxu0 0.0
    %1698 = vmatpush1.msra.mxu0 0.0
    %1699 = vmatprep.subr.mxu0 0.0
    %1700 = vmatpush1.msra.mxu0 0.0
    %1701 = vmatprep.subr.mxu0 0.0
    %1702 = vmatpush1.msra.mxu0 0.0
    %1703 = vmatprep.subr.mxu0 0.0
    %1704 = vmatpush1.msra.mxu0 0.0
    %1705 = vmatprep.subr.mxu0 0.0
    %1706 = vmatpush1.msra.mxu0 0.0
    %1707 = vmatprep.subr.mxu0 0.0
    %1708 = vmatpush1.msra.mxu0 0.0
    %1709 = vmatprep.subr.mxu0 0.0
    %1710 = vmatpush1.msra.mxu0 0.0
    %1711 = vmatprep.subr.mxu0 0.0
    %1712 = vmatpush1.msra.mxu0 0.0
    %1713 = vmatprep.subr.mxu0 0.0
    %1714 = vmatpush1.msra.mxu0 0.0
    %1715 = vmatprep.mubr.f32.mxu0 0.0
    %1716 = vmatmul.mubr.f32.gmra.mrb[0].mxu0 %v1646
    %v1717 = vpop.f32.mrb[0].mxu0
    %v1718 = vadd.f32 %v1644, %v1717
    %v1719 = vpop.f32.mrb[0].mxu0
    %1720 = vmatprep.mubr.f32.mxu0 0.0
    %1721 = vmatmul.mubr.f32.gmra.mrb[0].mxu0 %v1649
    %v1722 = vpop.f32.mrb[0].mxu0
    %v1723 = vadd.f32 %v1644, %v1722
    %v1724 = vpop.f32.mrb[0].mxu0
    %1725 = vdwg.mxu0
    %v1726 = vmul.f32 %v1718, 0.5
    %v1727 = vmul.f32 %v1723, 0.5
    %v1728 = vmul.f32 %v1718, 0.70710677
    %v1729 = vmul.f32 %v1723, 0.70710677
    %v1730 = verf.f32.pop %v1728
    %v1731 = verf.f32.pop %v1729
    %v1732 = vadd.f32 %v1730, 1.0
    %v1733 = vadd.f32 %v1731, 1.0
    %v1734 = vmul.f32 %v1726, %v1732
    %v1735 = vmul.f32 %v1727, %v1733
    %v1736 = vlaneseq
    %v1737 = vshrl.u32 %v1736, 7
    %v1738 = vsub.s32 0, %v1737
    %v1739 = vrot.slane %v1077, %v1738
    %v1741 = vsel %vm472, %v1734, 0
    %v1744 = vsel %vm472, %v1735, 0
    %1746 = vmatprep.subr.mxu0 0.0
    %1747 = vmatpush1.msra.mxu0 %v1064
    %1748 = vmatprep.subr.mxu0 0.0
    %1749 = vmatpush1.msra.mxu0 %v1065
    %1750 = vmatprep.subr.mxu0 0.0
    %1751 = vmatpush1.msra.mxu0 %v1066
    %1752 = vmatprep.subr.mxu0 0.0
    %1753 = vmatpush1.msra.mxu0 %v1067
    %1754 = vmatprep.subr.mxu0 0.0
    %1755 = vmatpush1.msra.mxu0 %v1068
    %1756 = vmatprep.subr.mxu0 0.0
    %1757 = vmatpush1.msra.mxu0 %v1069
    %1758 = vmatprep.subr.mxu0 0.0
    %1759 = vmatpush1.msra.mxu0 %v1070
    %1760 = vmatprep.subr.mxu0 0.0
    %1761 = vmatpush1.msra.mxu0 %v1071
    %1762 = vmatprep.subr.mxu0 0.0
    %1763 = vmatpush1.msra.mxu0 0.0
    %1764 = vmatprep.subr.mxu0 0.0
    %1765 = vmatpush1.msra.mxu0 0.0
    %1766 = vmatprep.subr.mxu0 0.0
    %1767 = vmatpush1.msra.mxu0 0.0
    %1768 = vmatprep.subr.mxu0 0.0
    %1769 = vmatpush1.msra.mxu0 0.0
    %1770 = vmatprep.subr.mxu0 0.0
    %1771 = vmatpush1.msra.mxu0 0.0
    %1772 = vmatprep.subr.mxu0 0.0
    %1773 = vmatpush1.msra.mxu0 0.0
    %1774 = vmatprep.subr.mxu0 0.0
    %1775 = vmatpush1.msra.mxu0 0.0
    %1776 = vmatprep.subr.mxu0 0.0
    %1777 = vmatpush1.msra.mxu0 0.0
    %1778 = vmatprep.subr.mxu0 0.0
    %1779 = vmatpush1.msra.mxu0 0.0
    %1780 = vmatprep.subr.mxu0 0.0
    %1781 = vmatpush1.msra.mxu0 0.0
    %1782 = vmatprep.subr.mxu0 0.0
    %1783 = vmatpush1.msra.mxu0 0.0
    %1784 = vmatprep.subr.mxu0 0.0
    %1785 = vmatpush1.msra.mxu0 0.0
    %1786 = vmatprep.subr.mxu0 0.0
    %1787 = vmatpush1.msra.mxu0 0.0
    %1788 = vmatprep.subr.mxu0 0.0
    %1789 = vmatpush1.msra.mxu0 0.0
    %1790 = vmatprep.subr.mxu0 0.0
    %1791 = vmatpush1.msra.mxu0 0.0
    %1792 = vmatprep.subr.mxu0 0.0
    %1793 = vmatpush1.msra.mxu0 0.0
    %1794 = vmatprep.subr.mxu0 0.0
    %1795 = vmatpush1.msra.mxu0 0.0
    %1796 = vmatprep.subr.mxu0 0.0
    %1797 = vmatpush1.msra.mxu0 0.0
    %1798 = vmatprep.subr.mxu0 0.0
    %1799 = vmatpush1.msra.mxu0 0.0
    %1800 = vmatprep.subr.mxu0 0.0
    %1801 = vmatpush1.msra.mxu0 0.0
    %1802 = vmatprep.subr.mxu0 0.0
    %1803 = vmatpush1.msra.mxu0 0.0
    %1804 = vmatprep.subr.mxu0 0.0
    %1805 = vmatpush1.msra.mxu0 0.0
    %1806 = vmatprep.subr.mxu0 0.0
    %1807 = vmatpush1.msra.mxu0 0.0
    %1808 = vmatprep.subr.mxu0 0.0
    %1809 = vmatpush1.msra.mxu0 0.0
    %1810 = vmatprep.mubr.f32.mxu0 0.0
    %1811 = vmatmul.mubr.f32.gmra.mrb[0].mxu0 %v1741
    %v1812 = vpop.f32.mrb[0].mxu0
    %v1813 = vadd.f32 %v1739, %v1812
    %v1814 = vpop.f32.mrb[0].mxu0
    %1815 = vmatprep.mubr.f32.mxu0 0.0
    %1816 = vmatmul.mubr.f32.gmra.mrb[0].mxu0 %v1744
    %v1817 = vpop.f32.mrb[0].mxu0
    %v1818 = vadd.f32 %v1739, %v1817
    %v1819 = vpop.f32.mrb[0].mxu0
    %1820 = vdwg.mxu0
    %v1821 = vadd.f32 %v1813, %v1639
    %v1822 = vadd.f32 %v1818, %v1640
    %v1823 = vsel %vm116, %v1821, 0.0
    %1824 = vadd.xlane.f32.xlu0 %v1823
    %v1825 = vpop.xlane.xlu0 %1824
    %v1826 = vsel %vm116, %v1822, 0.0
    %1827 = vadd.xlane.f32.xlu0 %v1826
    %v1828 = vpop.xlane.xlu0 %1827
    %v1829 = vmul.f32 %v1825, %v123
    %v1830 = vmul.f32 %v1828, %v123
    %v1831 = vsub.f32 %v1821, %v1829
    %v1832 = vsub.f32 %v1822, %v1830
    %v1833 = vmul.f32 %v1831, %v1831
    %v1834 = vmul.f32 %v1832, %v1832
    %v1835 = vsel %vm116, %v1833, 0.0
    %1836 = vadd.xlane.f32.xlu0 %v1835
    %v1837 = vpop.xlane.xlu0 %1836
    %v1838 = vsel %vm116, %v1834, 0.0
    %1839 = vadd.xlane.f32.xlu0 %v1838
    %v1840 = vpop.xlane.xlu0 %1839
    %v1841 = vmul.f32 %v1837, %v123
    %v1842 = vmul.f32 %v1840, %v123
    %v1843 = vadd.f32 %v1841, 1e-12
    %v1844 = vadd.f32 %v1842, 1e-12
    %v1845 = vrsqrt.pop %v1843
    %v1846 = vrsqrt.pop %v1844
    %v1847 = vmul.f32 %v1831, %v1845
    %v1848 = vmul.f32 %v1832, %v1846
    %v1849 = vlaneseq
    %v1850 = vshrl.u32 %v1849, 7
    %v1851 = vsub.s32 0, %v1850
    %v1852 = vrot.slane %v1078, %v1851
    %v1853 = vmul.f32 %v1847, %v1852
    %v1854 = vmul.f32 %v1848, %v1852
    %v1855 = vlaneseq
    %v1856 = vshrl.u32 %v1855, 7
    %v1857 = vsub.s32 0, %v1856
    %v1858 = vrot.slane %v1079, %v1857
    %v1859 = vadd.f32 %v1853, %v1858
    %v1860 = vadd.f32 %v1854, %v1858
    %1861 = vst.msk [vmem:[#allocation2] sm:$0xff] %vm116, %v1859
    %1862 = vst.msk [vmem:[#allocation2 + $0x8] sm:$0xff] %vm116, %v1860
    // Predicated region
    $region14: #{abrep_forward.1} parent=1 // pred_check
      _
    $region15: #{abrep_forward.1} parent=1 // pred_check_branch
      %1864 = sbr.rel (0) target = $region17
    $region16: #{abrep_forward.1} parent=1 // pred_region
      %s1866 = ssub.s32 256, 256
      %1867 = vsyncadd [#allocation3], %s1866
      %s1868 = sshll.u32 [#allocation2], 4
      %s1869 = int_to_ptr.vmem [resolvable:$true] %s1868
      %1874 = dma.vmem_to_hbm [thread:$0]  %s1869, 256, %s3, [#allocation3], 128, 128, 8
    $region17: #{abrep_forward.1} parent=1 // pred_fallthru
      _
    // Predicated region
    $region18: #{abrep_forward.1} parent=1 // pred_check
      _
    $region19: #{abrep_forward.1} parent=1 // pred_check_branch
      %1876 = sbr.rel (0) target = $region21
    $region20: #{abrep_forward.1} parent=1 // pred_region
      %1877 = dma.done [#allocation3], 256
    $region21: #{abrep_forward.1} parent=1 // pred_fallthru
      _
    %1878 = vsyncpa [#allocation3], 1

</llo_original>
